<compile_context>
chip_gen: v7x
topology: tpu7x:2x2x1
jax: 0.10.0
libtpu: 0.0.40
codegen_flags: <defaults>
</compile_context>

<pallas_src>
import functools
import math

import jax
import jax.numpy as jnp
from jax.experimental import pallas as pl
from jax.experimental.pallas import tpu as pltpu

_COMPUTE_DTYPE = jnp.bfloat16
_SQRT_2_OVER_PI = 0.7978845608028654


# ----------------------------- shared math ---------------------------------

def _gelu(x):
    # tanh-approximate GELU (transcendental goes to the EUP slot; ~1e-3 from exact erf).
    return 0.5 * x * (1.0 + jnp.tanh(_SQRT_2_OVER_PI * (x + 0.044715 * x * x * x)))


def _layer_norm(x, gamma, beta, eps=1e-5):
    mu = jnp.mean(x, axis=-1, keepdims=True)
    var = jnp.mean(jnp.square(x - mu), axis=-1, keepdims=True)
    return (x - mu) * jax.lax.rsqrt(var + eps) * gamma + beta


def _message(hV_tile, hV_all, hE_flat, eidx, Ws, We, Wn, b1, W2, b2, W3, b3):
    """W3(gelu(W2(gelu(W1(cat[self, edge, nbr]))))) without materializing the concat.

    hV_tile: [TN, H] f32     nodes owning the edges of this tile
    hV_all : [N,  H] f32     all nodes (for the neighbor gather)
    hE_flat: [TN*K, H] f32   tile edges, flattened
    eidx   : [TN, K] i32
    returns: [TN, K, H] f32
    """
    TN, K = eidx.shape
    N, H = hV_all.shape
    cd = _COMPUTE_DTYPE

    # First layer, split by concat segment (original concat order: [self | edge | nbr]).
    proj_self = jnp.dot(hV_tile.astype(cd), Ws, preferred_element_type=jnp.float32)   # [TN, H]
    proj_nbr = jnp.dot(hV_all.astype(cd), Wn, preferred_element_type=jnp.float32)     # [N, H]
    proj_edge = jnp.dot(hE_flat.astype(cd), We, preferred_element_type=jnp.float32)   # [TN*K, H]

    # Gather the *projected* neighbor features via a bf16 one-hot matmul (exact for 0/1).
    iota = jax.lax.broadcasted_iota(jnp.int32, (TN, K, N), 2)
    onehot = (eidx[:, :, None] == iota).astype(cd).reshape(TN * K, N)
    gathered = jnp.dot(onehot, proj_nbr.astype(cd),
                       preferred_element_type=jnp.float32)                             # [TN*K, H]

    m = (proj_edge + gathered).reshape(TN, K, H) + proj_self[:, None, :] + b1
    m = _gelu(m).reshape(TN * K, H)
    m = _gelu(jnp.dot(m.astype(cd), W2, preferred_element_type=jnp.float32) + b2)
    m = jnp.dot(m.astype(cd), W3, preferred_element_type=jnp.float32) + b3
    return m.reshape(TN, K, H)


# -------------------------------- kernels -----------------------------------

def _node_update_kernel(inv_scale,
                        hVt_ref, hVf_ref, hE_ref, eidx_ref, mV_ref, mA_ref,
                        W1s_ref, W1e_ref, W1n_ref, b1_ref,
                        W2_ref, b2_ref, W3_ref, b3_ref,
                        Wi_ref, bi_ref, Wo_ref, bo_ref,
                        g1_ref, be1_ref, g2_ref, be2_ref,
                        hV_out_ref):
    hV_tile = hVt_ref[0].astype(jnp.float32)   # [TN, H]
    hV_all = hVf_ref[0].astype(jnp.float32)    # [N, H]
    hE = hE_ref[0]                             # [TN, K, H]
    eidx = eidx_ref[0]                         # [TN, K]
    mV = mV_ref[0]                             # [TN, 1]
    mA = mA_ref[0]                             # [TN, K]
    TN, K, H = hE.shape
    cd = _COMPUTE_DTYPE

    hE_flat = hE.reshape(TN * K, H).astype(jnp.float32)

    h_message = _message(hV_tile, hV_all, hE_flat, eidx,
                         W1s_ref[...], W1e_ref[...], W1n_ref[...], b1_ref[...],
                         W2_ref[...], b2_ref[...], W3_ref[...], b3_ref[...])
    h_message = h_message * mA[:, :, None]                       # mask_attend
    dh = jnp.sum(h_message, axis=1) * inv_scale                  # [TN, H]

    hV1 = _layer_norm(hV_tile + dh, g1_ref[...], be1_ref[...])   # dropout1 = id
    ff = _gelu(jnp.dot(hV1.astype(cd), Wi_ref[...],
                       preferred_element_type=jnp.float32) + bi_ref[...])
    dh2 = jnp.dot(ff.astype(cd), Wo_ref[...],
                  preferred_element_type=jnp.float32) + bo_ref[...]
    hV2 = _layer_norm(hV1 + dh2, g2_ref[...], be2_ref[...])      # dropout2 = id
    hV2 = hV2 * mV                                               # mask_V
    hV_out_ref[0] = hV2.astype(hV_out_ref.dtype)


def _edge_update_kernel(hVt_ref, hVf_ref, hE_ref, eidx_ref,
                        W11s_ref, W11e_ref, W11n_ref, b11_ref,
                        W12_ref, b12_ref, W13_ref, b13_ref,
                        g3_ref, be3_ref,
                        hE_out_ref):
    hV_tile = hVt_ref[0].astype(jnp.float32)   # [TN, H]  (updated nodes, tile)
    hV_all = hVf_ref[0].astype(jnp.float32)    # [N, H]   (updated nodes, full)
    hE = hE_ref[0].astype(jnp.float32)         # [TN, K, H] (original edges)
    eidx = eidx_ref[0]                         # [TN, K]
    TN, K, H = hE.shape

    h_message = _message(hV_tile, hV_all, hE.reshape(TN * K, H), eidx,
                         W11s_ref[...], W11e_ref[...], W11n_ref[...], b11_ref[...],
                         W12_ref[...], b12_ref[...], W13_ref[...], b13_ref[...])
    hE_new = _layer_norm(hE + h_message, g3_ref[...], be3_ref[...])   # dropout3 = id
    hE_out_ref[0] = hE_new.astype(hE_out_ref.dtype)


# ------------------------------- wrapper ------------------------------------

def _pick_tile_n(N, target=128):
    if N <= target:
        return N
    for t in range(target, 7, -1):
        if N % t == 0 and t % 8 == 0:
            return t
    return N


def enc_layer(h_V, h_E, E_idx, params, mask_V=None, mask_attend=None,
              scale=30.0, tile_n=None):
    B, N, H = h_V.shape
    K = h_E.shape[2]
    f32, bf16 = jnp.float32, _COMPUTE_DTYPE

    if mask_V is None:
        mask_V = jnp.ones((B, N), h_V.dtype)
    if mask_attend is None:
        mask_attend = jnp.ones((B, N, K), h_V.dtype)
    mV = mask_V.reshape(B, N, 1).astype(h_V.dtype)            # tiny lane pad only
    mA = mask_attend.reshape(B, N, K).astype(h_V.dtype)       # lane-dense (no (.,1) pad)

    if tile_n is None:
        tile_n = _pick_tile_n(N)
    assert N % tile_n == 0 and (tile_n % 8 == 0 or tile_n == N)
    TN, nN = tile_n, N // tile_n

    def vec(p):     # biases / LayerNorm params as (1, X) f32
        return jnp.asarray(p, f32).reshape(1, -1)

    def wsplit(W):  # (3H, H) stored [in, out] -> self / edge / nbr slices, bf16
        W = jnp.asarray(W)
        return (W[:H].astype(bf16), W[H:2 * H].astype(bf16), W[2 * H:].astype(bf16))

    W1s, W1e, W1n = wsplit(params["W1"])
    W11s, W11e, W11n = wsplit(params["W11"])
    node_params = [
        W1s, W1e, W1n, vec(params["b1"]),
        jnp.asarray(params["W2"], bf16), vec(params["b2"]),
        jnp.asarray(params["W3"], bf16), vec(params["b3"]),
        jnp.asarray(params["Wi"], bf16), vec(params["bi"]),
        jnp.asarray(params["Wo"], bf16), vec(params["bo"]),
        vec(params["g1"]), vec(params["be1"]),
        vec(params["g2"]), vec(params["be2"]),
    ]
    edge_params = [
        W11s, W11e, W11n, vec(params["b11"]),
        jnp.asarray(params["W12"], bf16), vec(params["b12"]),
        jnp.asarray(params["W13"], bf16), vec(params["b13"]),
        vec(params["g3"]), vec(params["be3"]),
    ]

    def bcast_spec(shape):
        zeros = (0,) * len(shape)
        return pl.BlockSpec(shape, lambda b, n, _z=zeros: _z)

    cparams = pltpu.CompilerParams(
        dimension_semantics=("parallel", "parallel"),
        vmem_limit_bytes=64 * 1024 * 1024,
    )

    # ---- pass 1: node update, tiled over (B, N/TN) ----
    node_in_specs = [
        pl.BlockSpec((1, TN, H), lambda b, n: (b, n, 0)),         # h_V tile (self term)
        pl.BlockSpec((1, N, H), lambda b, n: (b, 0, 0)),          # h_V full (gather)
        pl.BlockSpec((1, TN, K, H), lambda b, n: (b, n, 0, 0)),   # h_E tile
        pl.BlockSpec((1, TN, K), lambda b, n: (b, n, 0)),         # E_idx tile
        pl.BlockSpec((1, TN, 1), lambda b, n: (b, n, 0)),         # mask_V tile
        pl.BlockSpec((1, TN, K), lambda b, n: (b, n, 0)),         # mask_attend tile
    ] + [bcast_spec(p.shape) for p in node_params]

    hV_new = pl.pallas_call(
        functools.partial(_node_update_kernel, float(1.0 / scale)),
        grid=(B, nN),
        in_specs=node_in_specs,
        out_specs=pl.BlockSpec((1, TN, H), lambda b, n: (b, n, 0)),
        out_shape=jax.ShapeDtypeStruct((B, N, H), h_V.dtype),
        compiler_params=cparams,
    )(h_V, h_V, h_E, E_idx, mV, mA, *node_params)

    # ---- pass 2: edge update, tiled over (B, N/TN); re-reads full updated h_V ----
    edge_in_specs = [
        pl.BlockSpec((1, TN, H), lambda b, n: (b, n, 0)),         # h_V' tile
        pl.BlockSpec((1, N, H), lambda b, n: (b, 0, 0)),          # h_V' full (gather)
        pl.BlockSpec((1, TN, K, H), lambda b, n: (b, n, 0, 0)),   # h_E tile
        pl.BlockSpec((1, TN, K), lambda b, n: (b, n, 0)),         # E_idx tile
    ] + [bcast_spec(p.shape) for p in edge_params]

    hE_new = pl.pallas_call(
        _edge_update_kernel,
        grid=(B, nN),
        in_specs=edge_in_specs,
        out_specs=pl.BlockSpec((1, TN, K, H), lambda b, n: (b, n, 0, 0)),
        out_shape=jax.ShapeDtypeStruct((B, N, K, H), h_E.dtype),
        compiler_params=cparams,
    )(hV_new, hV_new, h_E, E_idx, *edge_params)

    return hV_new, hE_new


# ------------------------- params & pure-JAX reference ----------------------

def init_params(key, H):
    """Deterministic synthetic init (PyTorch-Linear-style uniform ranges).
    Linear weights are stored pre-transposed as [in, out]."""
    num_in = 2 * H

    def linear(k, fan_in, fan_out):
        k1, k2 = jax.random.split(k)
        lim = 1.0 / math.sqrt(fan_in)
        W = jax.random.uniform(k1, (fan_in, fan_out), jnp.float32, -lim, lim)
        b = jax.random.uniform(k2, (1, fan_out), jnp.float32, -lim, lim)
        return W, b

    ks = jax.random.split(key, 8)
    p = {}
    p["W1"], p["b1"] = linear(ks[0], H + num_in, H)
    p["W2"], p["b2"] = linear(ks[1], H, H)
    p["W3"], p["b3"] = linear(ks[2], H, H)
    p["W11"], p["b11"] = linear(ks[3], H + num_in, H)
    p["W12"], p["b12"] = linear(ks[4], H, H)
    p["W13"], p["b13"] = linear(ks[5], H, H)
    p["Wi"], p["bi"] = linear(ks[6], H, 4 * H)      # PositionWiseFeedForward.W_in
    p["Wo"], p["bo"] = linear(ks[7], 4 * H, H)      # PositionWiseFeedForward.W_out
    for i in (1, 2, 3):
        p[f"g{i}"] = jnp.ones((1, H), jnp.float32)   # LayerNorm gamma
        p[f"be{i}"] = jnp.zeros((1, H), jnp.float32)  # LayerNorm beta
    return p


def enc_layer_reference(h_V, h_E, E_idx, params, mask_V, mask_attend, scale=30.0):
    """Pure-JAX f32 reference matching the PyTorch EncLayer (eval mode, tanh-GELU)."""
    p = params
    B, N, H = h_V.shape
    K = E_idx.shape[-1]

    def gather_nodes(nodes):
        return jax.vmap(lambda nv, ni: nv[ni])(nodes, E_idx)            # [B,N,K,H]

    def message(nodes, W, b, W2, b2, W3, b3):
        h_EV = jnp.concatenate(
            [jnp.broadcast_to(nodes[:, :, None, :], (B, N, K, H)), h_E, gather_nodes(nodes)],
            axis=-1)
        m = _gelu(h_EV @ W + b)
        m = _gelu(m @ W2 + b2)
        return m @ W3 + b3

    hm = message(h_V, p["W1"], p["b1"], p["W2"], p["b2"], p["W3"], p["b3"])
    hm = hm * mask_attend[..., None]
    dh = jnp.sum(hm, axis=-2) / scale
    hV1 = _layer_norm(h_V + dh, p["g1"], p["be1"])
    dh = _gelu(hV1 @ p["Wi"] + p["bi"]) @ p["Wo"] + p["bo"]
    hV2 = _layer_norm(hV1 + dh, p["g2"], p["be2"]) * mask_V[..., None]
    m2 = message(hV2, p["W11"], p["b11"], p["W12"], p["b12"], p["W13"], p["b13"])
    hE2 = _layer_norm(h_E + m2, p["g3"], p["be3"])
    return hV2, hE2


if __name__ == "__main__":
    B, N, K, H = 2, 8, 4, 32
    key = jax.random.PRNGKey(0)
    k1, k2, k3, k4, k5, kp = jax.random.split(key, 6)

    h_V = jax.random.normal(k1, (B, N, H), jnp.float32)
    h_E = jax.random.normal(k2, (B, N, K, H), jnp.float32)
    E_idx = jax.random.randint(k3, (B, N, K), 0, N, jnp.int32)
    mask_V = (jax.random.uniform(k4, (B, N)) > 0.1).astype(jnp.float32)
    mask_attend = (jax.random.uniform(k5, (B, N, K)) > 0.1).astype(jnp.float32)

    params = init_params(kp, H)

    hV_new, hE_new = enc_layer(h_V, h_E, E_idx, params, mask_V, mask_attend, scale=30.0)
    jax.block_until_ready((hV_new, hE_new))
    assert hV_new.shape == (B, N, H) and hE_new.shape == (B, N, K, H)

    hV_exp, hE_exp = enc_layer_reference(h_V, h_E, E_idx, params, mask_V, mask_attend, 30.0)
    err_v = float(jnp.max(jnp.abs(hV_new - hV_exp)))
    err_e = float(jnp.max(jnp.abs(hE_new - hE_exp)))
    assert err_v < 0.1 and err_e < 0.1, (err_v, err_e)   # bf16-matmul tolerance

    print("KERNEL_OK")
</pallas_src>

<mosaic_0001>
module attributes {stable_mosaic.version = 11 : i64} {
  func.func @_node_update_kernel(%arg0: i32, %arg1: i32, %arg2: memref<1x8x32xf32, #tpu.memory_space<vmem>>, %arg3: memref<1x8x32xf32, #tpu.memory_space<vmem>>, %arg4: memref<1x8x4x32xf32, #tpu.memory_space<vmem>>, %arg5: memref<1x8x4xi32, #tpu.memory_space<vmem>>, %arg6: memref<1x8x1xf32, #tpu.memory_space<vmem>>, %arg7: memref<1x8x4xf32, #tpu.memory_space<vmem>>, %arg8: memref<32x32xbf16, #tpu.memory_space<vmem>>, %arg9: memref<32x32xbf16, #tpu.memory_space<vmem>>, %arg10: memref<32x32xbf16, #tpu.memory_space<vmem>>, %arg11: memref<1x32xf32, #tpu.memory_space<vmem>>, %arg12: memref<32x32xbf16, #tpu.memory_space<vmem>>, %arg13: memref<1x32xf32, #tpu.memory_space<vmem>>, %arg14: memref<32x32xbf16, #tpu.memory_space<vmem>>, %arg15: memref<1x32xf32, #tpu.memory_space<vmem>>, %arg16: memref<32x128xbf16, #tpu.memory_space<vmem>>, %arg17: memref<1x128xf32, #tpu.memory_space<vmem>>, %arg18: memref<128x32xbf16, #tpu.memory_space<vmem>>, %arg19: memref<1x32xf32, #tpu.memory_space<vmem>>, %arg20: memref<1x32xf32, #tpu.memory_space<vmem>>, %arg21: memref<1x32xf32, #tpu.memory_space<vmem>>, %arg22: memref<1x32xf32, #tpu.memory_space<vmem>>, %arg23: memref<1x32xf32, #tpu.memory_space<vmem>>, %arg24: memref<1x8x32xf32, #tpu.memory_space<vmem>>) attributes {dimension_semantics = [#tpu.dimension_semantics<parallel>, #tpu.dimension_semantics<parallel>], iteration_bounds = array<i64: 2, 1>, scalar_prefetch = 0 : i64, scratch_operands = 0 : i64, tpu.core_type = #tpu.core_type<tc>, window_params = [{transform_indices = @transform_0, window_bounds = array<i64: 1, 8, 32>}, {transform_indices = @transform_1, window_bounds = array<i64: 1, 8, 32>}, {transform_indices = @transform_2, window_bounds = array<i64: 1, 8, 4, 32>}, {transform_indices = @transform_3, window_bounds = array<i64: 1, 8, 4>}, {transform_indices = @transform_4, window_bounds = array<i64: 1, 8, 1>}, {transform_indices = @transform_5, window_bounds = array<i64: 1, 8, 4>}, {pipeline_mode = #tpu.pipeline_mode<synchronous>, transform_indices = @transform_6, window_bounds = array<i64: 32, 32>}, {pipeline_mode = #tpu.pipeline_mode<synchronous>, transform_indices = @transform_7, window_bounds = array<i64: 32, 32>}, {pipeline_mode = #tpu.pipeline_mode<synchronous>, transform_indices = @transform_8, window_bounds = array<i64: 32, 32>}, {pipeline_mode = #tpu.pipeline_mode<synchronous>, transform_indices = @transform_9, window_bounds = array<i64: 1, 32>}, {pipeline_mode = #tpu.pipeline_mode<synchronous>, transform_indices = @transform_10, window_bounds = array<i64: 32, 32>}, {pipeline_mode = #tpu.pipeline_mode<synchronous>, transform_indices = @transform_11, window_bounds = array<i64: 1, 32>}, {pipeline_mode = #tpu.pipeline_mode<synchronous>, transform_indices = @transform_12, window_bounds = array<i64: 32, 32>}, {pipeline_mode = #tpu.pipeline_mode<synchronous>, transform_indices = @transform_13, window_bounds = array<i64: 1, 32>}, {pipeline_mode = #tpu.pipeline_mode<synchronous>, transform_indices = @transform_14, window_bounds = array<i64: 32, 128>}, {pipeline_mode = #tpu.pipeline_mode<synchronous>, transform_indices = @transform_15, window_bounds = array<i64: 1, 128>}, {pipeline_mode = #tpu.pipeline_mode<synchronous>, transform_indices = @transform_16, window_bounds = array<i64: 128, 32>}, {pipeline_mode = #tpu.pipeline_mode<synchronous>, transform_indices = @transform_17, window_bounds = array<i64: 1, 32>}, {pipeline_mode = #tpu.pipeline_mode<synchronous>, transform_indices = @transform_18, window_bounds = array<i64: 1, 32>}, {pipeline_mode = #tpu.pipeline_mode<synchronous>, transform_indices = @transform_19, window_bounds = array<i64: 1, 32>}, {pipeline_mode = #tpu.pipeline_mode<synchronous>, transform_indices = @transform_20, window_bounds = array<i64: 1, 32>}, {pipeline_mode = #tpu.pipeline_mode<synchronous>, transform_indices = @transform_21, window_bounds = array<i64: 1, 32>}, {transform_indices = @transform_22, window_bounds = array<i64: 1, 8, 32>}]} {
    %c0 = arith.constant 0 : index
    %c0_0 = arith.constant 0 : index
    %c0_1 = arith.constant 0 : index
    %0 = vector.load %arg2[%c0, %c0_0, %c0_1] : memref<1x8x32xf32, #tpu.memory_space<vmem>>, vector<1x8x32xf32>
    %1 = vector.shape_cast %0 : vector<1x8x32xf32> to vector<8x32xf32>
    %c0_2 = arith.constant 0 : index
    %c0_3 = arith.constant 0 : index
    %c0_4 = arith.constant 0 : index
    %2 = vector.load %arg3[%c0_2, %c0_3, %c0_4] : memref<1x8x32xf32, #tpu.memory_space<vmem>>, vector<1x8x32xf32>
    %3 = vector.shape_cast %2 : vector<1x8x32xf32> to vector<8x32xf32>
    %c0_5 = arith.constant 0 : index
    %c0_6 = arith.constant 0 : index
    %c0_7 = arith.constant 0 : index
    %c0_8 = arith.constant 0 : index
    %4 = vector.load %arg4[%c0_5, %c0_6, %c0_7, %c0_8] : memref<1x8x4x32xf32, #tpu.memory_space<vmem>>, vector<1x8x4x32xf32>
    %5 = vector.shape_cast %4 : vector<1x8x4x32xf32> to vector<8x4x32xf32>
    %c0_9 = arith.constant 0 : index
    %c0_10 = arith.constant 0 : index
    %c0_11 = arith.constant 0 : index
    %6 = vector.load %arg5[%c0_9, %c0_10, %c0_11] : memref<1x8x4xi32, #tpu.memory_space<vmem>>, vector<1x8x4xi32>
    %7 = vector.shape_cast %6 : vector<1x8x4xi32> to vector<8x4xi32>
    %c0_12 = arith.constant 0 : index
    %c0_13 = arith.constant 0 : index
    %c0_14 = arith.constant 0 : index
    %8 = vector.load %arg6[%c0_12, %c0_13, %c0_14] : memref<1x8x1xf32, #tpu.memory_space<vmem>>, vector<1x8x1xf32>
    %9 = vector.shape_cast %8 : vector<1x8x1xf32> to vector<8x1xf32>
    %c0_15 = arith.constant 0 : index
    %c0_16 = arith.constant 0 : index
    %c0_17 = arith.constant 0 : index
    %10 = vector.load %arg7[%c0_15, %c0_16, %c0_17] : memref<1x8x4xf32, #tpu.memory_space<vmem>>, vector<1x8x4xf32>
    %11 = vector.shape_cast %10 : vector<1x8x4xf32> to vector<8x4xf32>
    %12 = vector.shape_cast %5 : vector<8x4x32xf32> to vector<32x32xf32>
    %c0_18 = arith.constant 0 : index
    %c0_19 = arith.constant 0 : index
    %13 = vector.load %arg8[%c0_18, %c0_19] : memref<32x32xbf16, #tpu.memory_space<vmem>>, vector<32x32xbf16>
    %c0_20 = arith.constant 0 : index
    %c0_21 = arith.constant 0 : index
    %14 = vector.load %arg9[%c0_20, %c0_21] : memref<32x32xbf16, #tpu.memory_space<vmem>>, vector<32x32xbf16>
    %c0_22 = arith.constant 0 : index
    %c0_23 = arith.constant 0 : index
    %15 = vector.load %arg10[%c0_22, %c0_23] : memref<32x32xbf16, #tpu.memory_space<vmem>>, vector<32x32xbf16>
    %c0_24 = arith.constant 0 : index
    %c0_25 = arith.constant 0 : index
    %16 = vector.load %arg11[%c0_24, %c0_25] : memref<1x32xf32, #tpu.memory_space<vmem>>, vector<1x32xf32>
    %c0_26 = arith.constant 0 : index
    %c0_27 = arith.constant 0 : index
    %17 = vector.load %arg12[%c0_26, %c0_27] : memref<32x32xbf16, #tpu.memory_space<vmem>>, vector<32x32xbf16>
    %c0_28 = arith.constant 0 : index
    %c0_29 = arith.constant 0 : index
    %18 = vector.load %arg13[%c0_28, %c0_29] : memref<1x32xf32, #tpu.memory_space<vmem>>, vector<1x32xf32>
    %c0_30 = arith.constant 0 : index
    %c0_31 = arith.constant 0 : index
    %19 = vector.load %arg14[%c0_30, %c0_31] : memref<32x32xbf16, #tpu.memory_space<vmem>>, vector<32x32xbf16>
    %c0_32 = arith.constant 0 : index
    %c0_33 = arith.constant 0 : index
    %20 = vector.load %arg15[%c0_32, %c0_33] : memref<1x32xf32, #tpu.memory_space<vmem>>, vector<1x32xf32>
    %21 = arith.truncf %1 : vector<8x32xf32> to vector<8x32xbf16>
    %cst = arith.constant dense<0.000000e+00> : vector<8x32xf32>
    %22 = tpu.matmul %21, %13, %cst {dimension_numbers = #tpu.dot_dimension_numbers<[1], [0], [0], [1], [0, 0, 1, 1], [], []>} : vector<8x32xbf16>, vector<32x32xbf16>, vector<8x32xf32> -> vector<8x32xf32>
    %23 = arith.truncf %3 : vector<8x32xf32> to vector<8x32xbf16>
    %cst_34 = arith.constant dense<0.000000e+00> : vector<8x32xf32>
    %24 = tpu.matmul %23, %15, %cst_34 {dimension_numbers = #tpu.dot_dimension_numbers<[1], [0], [0], [1], [0, 0, 1, 1], [], []>} : vector<8x32xbf16>, vector<32x32xbf16>, vector<8x32xf32> -> vector<8x32xf32>
    %25 = arith.truncf %12 : vector<32x32xf32> to vector<32x32xbf16>
    %cst_35 = arith.constant dense<0.000000e+00> : vector<32x32xf32>
    %26 = tpu.matmul %25, %14, %cst_35 {dimension_numbers = #tpu.dot_dimension_numbers<[1], [0], [0], [1], [0, 0, 1, 1], [], []>} : vector<32x32xbf16>, vector<32x32xbf16>, vector<32x32xf32> -> vector<32x32xf32>
    %27 = tpu.iota {dimensions = array<i32: 2>} : vector<8x4x8xi32>
    %28 = vector.shape_cast %7 : vector<8x4xi32> to vector<8x4x1xi32>
    %29 = vector.broadcast %28 : vector<8x4x1xi32> to vector<8x4x8xi32>
    %30 = arith.cmpi eq, %29, %27 : vector<8x4x8xi32>
    %31 = arith.extui %30 : vector<8x4x8xi1> to vector<8x4x8xi32>
    %32 = arith.sitofp %31 : vector<8x4x8xi32> to vector<8x4x8xf32>
    %33 = arith.truncf %32 : vector<8x4x8xf32> to vector<8x4x8xbf16>
    %34 = vector.shape_cast %33 : vector<8x4x8xbf16> to vector<32x8xbf16>
    %35 = arith.truncf %24 : vector<8x32xf32> to vector<8x32xbf16>
    %cst_36 = arith.constant dense<0.000000e+00> : vector<32x32xf32>
    %36 = tpu.matmul %34, %35, %cst_36 {dimension_numbers = #tpu.dot_dimension_numbers<[1], [0], [0], [1], [0, 0, 1, 1], [], []>} : vector<32x8xbf16>, vector<8x32xbf16>, vector<32x32xf32> -> vector<32x32xf32>
    %37 = arith.addf %26, %36 : vector<32x32xf32>
    %38 = vector.shape_cast %37 : vector<32x32xf32> to vector<8x4x32xf32>
    %39 = vector.shape_cast %22 : vector<8x32xf32> to vector<8x1x32xf32>
    %40 = vector.broadcast %39 : vector<8x1x32xf32> to vector<8x4x32xf32>
    %41 = arith.addf %38, %40 : vector<8x4x32xf32>
    %42 = vector.shape_cast %16 : vector<1x32xf32> to vector<1x1x32xf32>
    %43 = vector.broadcast %42 : vector<1x1x32xf32> to vector<8x4x32xf32>
    %44 = arith.addf %41, %43 : vector<8x4x32xf32>
    %cst_37 = arith.constant 5.000000e-01 : f32
    %45 = vector.broadcast %cst_37 : f32 to vector<8x4x32xf32>
    %46 = arith.mulf %45, %44 : vector<8x4x32xf32>
    %cst_38 = arith.constant 4.471500e-02 : f32
    %47 = vector.broadcast %cst_38 : f32 to vector<8x4x32xf32>
    %48 = arith.mulf %47, %44 : vector<8x4x32xf32>
    %49 = arith.mulf %48, %44 : vector<8x4x32xf32>
    %50 = arith.mulf %49, %44 : vector<8x4x32xf32>
    %51 = arith.addf %44, %50 : vector<8x4x32xf32>
    %cst_39 = arith.constant 0.797884583 : f32
    %52 = vector.broadcast %cst_39 : f32 to vector<8x4x32xf32>
    %53 = arith.mulf %52, %51 : vector<8x4x32xf32>
    %54 = math.tanh %53 : vector<8x4x32xf32>
    %cst_40 = arith.constant 1.000000e+00 : f32
    %55 = vector.broadcast %cst_40 : f32 to vector<8x4x32xf32>
    %56 = arith.addf %55, %54 : vector<8x4x32xf32>
    %57 = arith.mulf %46, %56 : vector<8x4x32xf32>
    %58 = vector.shape_cast %57 : vector<8x4x32xf32> to vector<32x32xf32>
    %59 = arith.truncf %58 : vector<32x32xf32> to vector<32x32xbf16>
    %cst_41 = arith.constant dense<0.000000e+00> : vector<32x32xf32>
    %60 = tpu.matmul %59, %17, %cst_41 {dimension_numbers = #tpu.dot_dimension_numbers<[1], [0], [0], [1], [0, 0, 1, 1], [], []>} : vector<32x32xbf16>, vector<32x32xbf16>, vector<32x32xf32> -> vector<32x32xf32>
    %61 = vector.broadcast %18 : vector<1x32xf32> to vector<32x32xf32>
    %62 = arith.addf %60, %61 : vector<32x32xf32>
    %cst_42 = arith.constant 5.000000e-01 : f32
    %63 = vector.broadcast %cst_42 : f32 to vector<32x32xf32>
    %64 = arith.mulf %63, %62 : vector<32x32xf32>
    %cst_43 = arith.constant 4.471500e-02 : f32
    %65 = vector.broadcast %cst_43 : f32 to vector<32x32xf32>
    %66 = arith.mulf %65, %62 : vector<32x32xf32>
    %67 = arith.mulf %66, %62 : vector<32x32xf32>
    %68 = arith.mulf %67, %62 : vector<32x32xf32>
    %69 = arith.addf %62, %68 : vector<32x32xf32>
    %cst_44 = arith.constant 0.797884583 : f32
    %70 = vector.broadcast %cst_44 : f32 to vector<32x32xf32>
    %71 = arith.mulf %70, %69 : vector<32x32xf32>
    %72 = math.tanh %71 : vector<32x32xf32>
    %cst_45 = arith.constant 1.000000e+00 : f32
    %73 = vector.broadcast %cst_45 : f32 to vector<32x32xf32>
    %74 = arith.addf %73, %72 : vector<32x32xf32>
    %75 = arith.mulf %64, %74 : vector<32x32xf32>
    %76 = arith.truncf %75 : vector<32x32xf32> to vector<32x32xbf16>
    %cst_46 = arith.constant dense<0.000000e+00> : vector<32x32xf32>
    %77 = tpu.matmul %76, %19, %cst_46 {dimension_numbers = #tpu.dot_dimension_numbers<[1], [0], [0], [1], [0, 0, 1, 1], [], []>} : vector<32x32xbf16>, vector<32x32xbf16>, vector<32x32xf32> -> vector<32x32xf32>
    %78 = vector.broadcast %20 : vector<1x32xf32> to vector<32x32xf32>
    %79 = arith.addf %77, %78 : vector<32x32xf32>
    %80 = vector.shape_cast %79 : vector<32x32xf32> to vector<8x4x32xf32>
    %81 = vector.shape_cast %11 : vector<8x4xf32> to vector<8x4x1xf32>
    %82 = vector.broadcast %81 : vector<8x4x1xf32> to vector<8x4x32xf32>
    %83 = arith.mulf %80, %82 : vector<8x4x32xf32>
    %cst_47 = arith.constant dense<0.000000e+00> : vector<8x32xf32>
    %84 = vector.multi_reduction <add>, %83, %cst_47 [1] : vector<8x4x32xf32> to vector<8x32xf32>
    %cst_48 = arith.constant 0.0333333351 : f32
    %85 = vector.broadcast %cst_48 : f32 to vector<8x32xf32>
    %86 = arith.mulf %84, %85 : vector<8x32xf32>
    %87 = arith.addf %1, %86 : vector<8x32xf32>
    %c0_49 = arith.constant 0 : index
    %c0_50 = arith.constant 0 : index
    %88 = vector.load %arg20[%c0_49, %c0_50] : memref<1x32xf32, #tpu.memory_space<vmem>>, vector<1x32xf32>
    %c0_51 = arith.constant 0 : index
    %c0_52 = arith.constant 0 : index
    %89 = vector.load %arg21[%c0_51, %c0_52] : memref<1x32xf32, #tpu.memory_space<vmem>>, vector<1x32xf32>
    %cst_53 = arith.constant dense<0.000000e+00> : vector<8xf32>
    %90 = vector.multi_reduction <add>, %87, %cst_53 [1] : vector<8x32xf32> to vector<8xf32>
    %91 = vector.shape_cast %90 : vector<8xf32> to vector<8x1xf32>
    %cst_54 = arith.constant 3.200000e+01 : f32
    %92 = vector.broadcast %cst_54 : f32 to vector<8x1xf32>
    %93 = arith.divf %91, %92 : vector<8x1xf32>
    %94 = vector.broadcast %93 : vector<8x1xf32> to vector<8x32xf32>
    %95 = arith.subf %87, %94 : vector<8x32xf32>
    %96 = arith.mulf %95, %95 : vector<8x32xf32>
    %cst_55 = arith.constant dense<0.000000e+00> : vector<8xf32>
    %97 = vector.multi_reduction <add>, %96, %cst_55 [1] : vector<8x32xf32> to vector<8xf32>
    %98 = vector.shape_cast %97 : vector<8xf32> to vector<8x1xf32>
    %cst_56 = arith.constant 3.200000e+01 : f32
    %99 = vector.broadcast %cst_56 : f32 to vector<8x1xf32>
    %100 = arith.divf %98, %99 : vector<8x1xf32>
    %101 = vector.broadcast %93 : vector<8x1xf32> to vector<8x32xf32>
    %102 = arith.subf %87, %101 : vector<8x32xf32>
    %cst_57 = arith.constant 9.99999974E-6 : f32
    %103 = vector.broadcast %cst_57 : f32 to vector<8x1xf32>
    %104 = arith.addf %100, %103 : vector<8x1xf32>
    %105 = math.rsqrt %104 : vector<8x1xf32>
    %106 = vector.broadcast %105 : vector<8x1xf32> to vector<8x32xf32>
    %107 = arith.mulf %102, %106 : vector<8x32xf32>
    %108 = vector.broadcast %88 : vector<1x32xf32> to vector<8x32xf32>
    %109 = arith.mulf %107, %108 : vector<8x32xf32>
    %110 = vector.broadcast %89 : vector<1x32xf32> to vector<8x32xf32>
    %111 = arith.addf %109, %110 : vector<8x32xf32>
    %112 = arith.truncf %111 : vector<8x32xf32> to vector<8x32xbf16>
    %c0_58 = arith.constant 0 : index
    %c0_59 = arith.constant 0 : index
    %113 = vector.load %arg16[%c0_58, %c0_59] : memref<32x128xbf16, #tpu.memory_space<vmem>>, vector<32x128xbf16>
    %cst_60 = arith.constant dense<0.000000e+00> : vector<8x128xf32>
    %114 = tpu.matmul %112, %113, %cst_60 {dimension_numbers = #tpu.dot_dimension_numbers<[1], [0], [0], [1], [0, 0, 1, 1], [], []>} : vector<8x32xbf16>, vector<32x128xbf16>, vector<8x128xf32> -> vector<8x128xf32>
    %c0_61 = arith.constant 0 : index
    %c0_62 = arith.constant 0 : index
    %115 = vector.load %arg17[%c0_61, %c0_62] : memref<1x128xf32, #tpu.memory_space<vmem>>, vector<1x128xf32>
    %116 = vector.broadcast %115 : vector<1x128xf32> to vector<8x128xf32>
    %117 = arith.addf %114, %116 : vector<8x128xf32>
    %cst_63 = arith.constant 5.000000e-01 : f32
    %118 = vector.broadcast %cst_63 : f32 to vector<8x128xf32>
    %119 = arith.mulf %118, %117 : vector<8x128xf32>
    %cst_64 = arith.constant 4.471500e-02 : f32
    %120 = vector.broadcast %cst_64 : f32 to vector<8x128xf32>
    %121 = arith.mulf %120, %117 : vector<8x128xf32>
    %122 = arith.mulf %121, %117 : vector<8x128xf32>
    %123 = arith.mulf %122, %117 : vector<8x128xf32>
    %124 = arith.addf %117, %123 : vector<8x128xf32>
    %cst_65 = arith.constant 0.797884583 : f32
    %125 = vector.broadcast %cst_65 : f32 to vector<8x128xf32>
    %126 = arith.mulf %125, %124 : vector<8x128xf32>
    %127 = math.tanh %126 : vector<8x128xf32>
    %cst_66 = arith.constant 1.000000e+00 : f32
    %128 = vector.broadcast %cst_66 : f32 to vector<8x128xf32>
    %129 = arith.addf %128, %127 : vector<8x128xf32>
    %130 = arith.mulf %119, %129 : vector<8x128xf32>
    %131 = arith.truncf %130 : vector<8x128xf32> to vector<8x128xbf16>
    %c0_67 = arith.constant 0 : index
    %c0_68 = arith.constant 0 : index
    %132 = vector.load %arg18[%c0_67, %c0_68] : memref<128x32xbf16, #tpu.memory_space<vmem>>, vector<128x32xbf16>
    %cst_69 = arith.constant dense<0.000000e+00> : vector<8x32xf32>
    %133 = tpu.matmul %131, %132, %cst_69 {dimension_numbers = #tpu.dot_dimension_numbers<[1], [0], [0], [1], [0, 0, 1, 1], [], []>} : vector<8x128xbf16>, vector<128x32xbf16>, vector<8x32xf32> -> vector<8x32xf32>
    %c0_70 = arith.constant 0 : index
    %c0_71 = arith.constant 0 : index
    %134 = vector.load %arg19[%c0_70, %c0_71] : memref<1x32xf32, #tpu.memory_space<vmem>>, vector<1x32xf32>
    %135 = vector.broadcast %134 : vector<1x32xf32> to vector<8x32xf32>
    %136 = arith.addf %133, %135 : vector<8x32xf32>
    %137 = arith.addf %111, %136 : vector<8x32xf32>
    %c0_72 = arith.constant 0 : index
    %c0_73 = arith.constant 0 : index
    %138 = vector.load %arg22[%c0_72, %c0_73] : memref<1x32xf32, #tpu.memory_space<vmem>>, vector<1x32xf32>
    %c0_74 = arith.constant 0 : index
    %c0_75 = arith.constant 0 : index
    %139 = vector.load %arg23[%c0_74, %c0_75] : memref<1x32xf32, #tpu.memory_space<vmem>>, vector<1x32xf32>
    %cst_76 = arith.constant dense<0.000000e+00> : vector<8xf32>
    %140 = vector.multi_reduction <add>, %137, %cst_76 [1] : vector<8x32xf32> to vector<8xf32>
    %141 = vector.shape_cast %140 : vector<8xf32> to vector<8x1xf32>
    %cst_77 = arith.constant 3.200000e+01 : f32
    %142 = vector.broadcast %cst_77 : f32 to vector<8x1xf32>
    %143 = arith.divf %141, %142 : vector<8x1xf32>
    %144 = vector.broadcast %143 : vector<8x1xf32> to vector<8x32xf32>
    %145 = arith.subf %137, %144 : vector<8x32xf32>
    %146 = arith.mulf %145, %145 : vector<8x32xf32>
    %cst_78 = arith.constant dense<0.000000e+00> : vector<8xf32>
    %147 = vector.multi_reduction <add>, %146, %cst_78 [1] : vector<8x32xf32> to vector<8xf32>
    %148 = vector.shape_cast %147 : vector<8xf32> to vector<8x1xf32>
    %cst_79 = arith.constant 3.200000e+01 : f32
    %149 = vector.broadcast %cst_79 : f32 to vector<8x1xf32>
    %150 = arith.divf %148, %149 : vector<8x1xf32>
    %151 = vector.broadcast %143 : vector<8x1xf32> to vector<8x32xf32>
    %152 = arith.subf %137, %151 : vector<8x32xf32>
    %cst_80 = arith.constant 9.99999974E-6 : f32
    %153 = vector.broadcast %cst_80 : f32 to vector<8x1xf32>
    %154 = arith.addf %150, %153 : vector<8x1xf32>
    %155 = math.rsqrt %154 : vector<8x1xf32>
    %156 = vector.broadcast %155 : vector<8x1xf32> to vector<8x32xf32>
    %157 = arith.mulf %152, %156 : vector<8x32xf32>
    %158 = vector.broadcast %138 : vector<1x32xf32> to vector<8x32xf32>
    %159 = arith.mulf %157, %158 : vector<8x32xf32>
    %160 = vector.broadcast %139 : vector<1x32xf32> to vector<8x32xf32>
    %161 = arith.addf %159, %160 : vector<8x32xf32>
    %162 = vector.broadcast %9 : vector<8x1xf32> to vector<8x32xf32>
    %163 = arith.mulf %161, %162 : vector<8x32xf32>
    %c0_81 = arith.constant 0 : index
    %c0_82 = arith.constant 0 : index
    %c0_83 = arith.constant 0 : index
    %164 = vector.load %arg24[%c0_81, %c0_82, %c0_83] : memref<1x8x32xf32, #tpu.memory_space<vmem>>, vector<1x8x32xf32>
    %165 = vector.shape_cast %164 : vector<1x8x32xf32> to vector<8x32xf32>
    %166 = vector.shape_cast %163 : vector<8x32xf32> to vector<1x8x32xf32>
    tpu.vector_store %arg24[%c0_81, %c0_82, %c0_83], %166 {strides = array<i32>} : memref<1x8x32xf32, #tpu.memory_space<vmem>>, vector<1x8x32xf32>,
    return
  }
  func.func @transform_0(%arg0: i32, %arg1: i32) -> (i32, i32, i32) {
    %c0_i32 = arith.constant 0 : i32
    %c0_i32_0 = arith.constant 0 : i32
    return %arg0, %arg1, %c0_i32 : i32, i32, i32
  }
  func.func @transform_1(%arg0: i32, %arg1: i32) -> (i32, i32, i32) {
    %c0_i32 = arith.constant 0 : i32
    %c0_i32_0 = arith.constant 0 : i32
    %c0_i32_1 = arith.constant 0 : i32
    return %arg0, %c0_i32, %c0_i32_0 : i32, i32, i32
  }
  func.func @transform_2(%arg0: i32, %arg1: i32) -> (i32, i32, i32, i32) {
    %c0_i32 = arith.constant 0 : i32
    %c0_i32_0 = arith.constant 0 : i32
    %c0_i32_1 = arith.constant 0 : i32
    return %arg0, %arg1, %c0_i32, %c0_i32_0 : i32, i32, i32, i32
  }
  func.func @transform_3(%arg0: i32, %arg1: i32) -> (i32, i32, i32) {
    %c0_i32 = arith.constant 0 : i32
    %c0_i32_0 = arith.constant 0 : i32
    return %arg0, %arg1, %c0_i32 : i32, i32, i32
  }
  func.func @transform_4(%arg0: i32, %arg1: i32) -> (i32, i32, i32) {
    %c0_i32 = arith.constant 0 : i32
    %c0_i32_0 = arith.constant 0 : i32
    return %arg0, %arg1, %c0_i32 : i32, i32, i32
  }
  func.func @transform_5(%arg0: i32, %arg1: i32) -> (i32, i32, i32) {
    %c0_i32 = arith.constant 0 : i32
    %c0_i32_0 = arith.constant 0 : i32
    return %arg0, %arg1, %c0_i32 : i32, i32, i32
  }
  func.func @transform_6(%arg0: i32, %arg1: i32) -> (i32, i32) {
    %c0_i32 = arith.constant 0 : i32
    %c0_i32_0 = arith.constant 0 : i32
    %c0_i32_1 = arith.constant 0 : i32
    return %c0_i32, %c0_i32_0 : i32, i32
  }
  func.func @transform_7(%arg0: i32, %arg1: i32) -> (i32, i32) {
    %c0_i32 = arith.constant 0 : i32
    %c0_i32_0 = arith.constant 0 : i32
    %c0_i32_1 = arith.constant 0 : i32
    return %c0_i32, %c0_i32_0 : i32, i32
  }
  func.func @transform_8(%arg0: i32, %arg1: i32) -> (i32, i32) {
    %c0_i32 = arith.constant 0 : i32
    %c0_i32_0 = arith.constant 0 : i32
    %c0_i32_1 = arith.constant 0 : i32
    return %c0_i32, %c0_i32_0 : i32, i32
  }
  func.func @transform_9(%arg0: i32, %arg1: i32) -> (i32, i32) {
    %c0_i32 = arith.constant 0 : i32
    %c0_i32_0 = arith.constant 0 : i32
    %c0_i32_1 = arith.constant 0 : i32
    return %c0_i32, %c0_i32_0 : i32, i32
  }
  func.func @transform_10(%arg0: i32, %arg1: i32) -> (i32, i32) {
    %c0_i32 = arith.constant 0 : i32
    %c0_i32_0 = arith.constant 0 : i32
    %c0_i32_1 = arith.constant 0 : i32
    return %c0_i32, %c0_i32_0 : i32, i32
  }
  func.func @transform_11(%arg0: i32, %arg1: i32) -> (i32, i32) {
    %c0_i32 = arith.constant 0 : i32
    %c0_i32_0 = arith.constant 0 : i32
    %c0_i32_1 = arith.constant 0 : i32
    return %c0_i32, %c0_i32_0 : i32, i32
  }
  func.func @transform_12(%arg0: i32, %arg1: i32) -> (i32, i32) {
    %c0_i32 = arith.constant 0 : i32
    %c0_i32_0 = arith.constant 0 : i32
    %c0_i32_1 = arith.constant 0 : i32
    return %c0_i32, %c0_i32_0 : i32, i32
  }
  func.func @transform_13(%arg0: i32, %arg1: i32) -> (i32, i32) {
    %c0_i32 = arith.constant 0 : i32
    %c0_i32_0 = arith.constant 0 : i32
    %c0_i32_1 = arith.constant 0 : i32
    return %c0_i32, %c0_i32_0 : i32, i32
  }
  func.func @transform_14(%arg0: i32, %arg1: i32) -> (i32, i32) {
    %c0_i32 = arith.constant 0 : i32
    %c0_i32_0 = arith.constant 0 : i32
    %c0_i32_1 = arith.constant 0 : i32
    return %c0_i32, %c0_i32_0 : i32, i32
  }
  func.func @transform_15(%arg0: i32, %arg1: i32) -> (i32, i32) {
    %c0_i32 = arith.constant 0 : i32
    %c0_i32_0 = arith.constant 0 : i32
    %c0_i32_1 = arith.constant 0 : i32
    return %c0_i32, %c0_i32_0 : i32, i32
  }
  func.func @transform_16(%arg0: i32, %arg1: i32) -> (i32, i32) {
    %c0_i32 = arith.constant 0 : i32
    %c0_i32_0 = arith.constant 0 : i32
    %c0_i32_1 = arith.constant 0 : i32
    return %c0_i32, %c0_i32_0 : i32, i32
  }
  func.func @transform_17(%arg0: i32, %arg1: i32) -> (i32, i32) {
    %c0_i32 = arith.constant 0 : i32
    %c0_i32_0 = arith.constant 0 : i32
    %c0_i32_1 = arith.constant 0 : i32
    return %c0_i32, %c0_i32_0 : i32, i32
  }
  func.func @transform_18(%arg0: i32, %arg1: i32) -> (i32, i32) {
    %c0_i32 = arith.constant 0 : i32
    %c0_i32_0 = arith.constant 0 : i32
    %c0_i32_1 = arith.constant 0 : i32
    return %c0_i32, %c0_i32_0 : i32, i32
  }
  func.func @transform_19(%arg0: i32, %arg1: i32) -> (i32, i32) {
    %c0_i32 = arith.constant 0 : i32
    %c0_i32_0 = arith.constant 0 : i32
    %c0_i32_1 = arith.constant 0 : i32
    return %c0_i32, %c0_i32_0 : i32, i32
  }
  func.func @transform_20(%arg0: i32, %arg1: i32) -> (i32, i32) {
    %c0_i32 = arith.constant 0 : i32
    %c0_i32_0 = arith.constant 0 : i32
    %c0_i32_1 = arith.constant 0 : i32
    return %c0_i32, %c0_i32_0 : i32, i32
  }
  func.func @transform_21(%arg0: i32, %arg1: i32) -> (i32, i32) {
    %c0_i32 = arith.constant 0 : i32
    %c0_i32_0 = arith.constant 0 : i32
    %c0_i32_1 = arith.constant 0 : i32
    return %c0_i32, %c0_i32_0 : i32, i32
  }
  func.func @transform_22(%arg0: i32, %arg1: i32) -> (i32, i32, i32) {
    %c0_i32 = arith.constant 0 : i32
    %c0_i32_0 = arith.constant 0 : i32
    return %arg0, %arg1, %c0_i32 : i32, i32, i32
  }
}

</mosaic_0001>

<llo_original>
// kernel: tpu_custom_call.1
$region0: #{tpu_custom_call.1}
  #allocation0 [shape = 'u32[]', space=smem, size = 0x4, offset = 0x4, fixed_abs, tag = 'smem constant byte address 0x4 - core index']
  #allocation1 [shape = 'u32[144,128]{1,0:T(1,128)}', space=vmem, size = 0x12000, scoped, tag = 'internal scratch']
  %s0 = inlined_call_operand.hbm [shape: f32[2,8,32], index: 0, kind: input, shape index: {}]
  %s1 = inlined_call_operand.hbm [shape: f32[2,8,32], index: 1, kind: input, shape index: {}]
  %s2 = inlined_call_operand.hbm [shape: f32[2,8,4,32], index: 2, kind: input, shape index: {}]
  %s3 = inlined_call_operand.hbm [shape: s32[2,8,4], index: 3, kind: input, shape index: {}]
  %s4 = inlined_call_operand.hbm [shape: f32[2,8,1], index: 4, kind: input, shape index: {}]
  %s5 = inlined_call_operand.hbm [shape: f32[2,8,4], index: 5, kind: input, shape index: {}]
  %s6 = inlined_call_operand.hbm [shape: bf16[32,32], index: 6, kind: input, shape index: {}]
  %s7 = inlined_call_operand.hbm [shape: bf16[32,32], index: 7, kind: input, shape index: {}]
  %s8 = inlined_call_operand.hbm [shape: bf16[32,32], index: 8, kind: input, shape index: {}]
  %s9 = inlined_call_operand.hbm [shape: f32[1,32], index: 9, kind: input, shape index: {}]
  %s10 = inlined_call_operand.hbm [shape: bf16[32,32], index: 10, kind: input, shape index: {}]
  %s11 = inlined_call_operand.hbm [shape: f32[1,32], index: 11, kind: input, shape index: {}]
  %s12 = inlined_call_operand.hbm [shape: bf16[32,32], index: 12, kind: input, shape index: {}]
  %s13 = inlined_call_operand.hbm [shape: f32[1,32], index: 13, kind: input, shape index: {}]
  %s14 = inlined_call_operand.hbm [shape: bf16[32,128], index: 14, kind: input, shape index: {}]
  %s15 = inlined_call_operand.hbm [shape: f32[1,128], index: 15, kind: input, shape index: {}]
  %s16 = inlined_call_operand.hbm [shape: bf16[128,32], index: 16, kind: input, shape index: {}]
  %s17 = inlined_call_operand.hbm [shape: f32[1,32], index: 17, kind: input, shape index: {}]
  %s18 = inlined_call_operand.hbm [shape: f32[1,32], index: 18, kind: input, shape index: {}]
  %s19 = inlined_call_operand.hbm [shape: f32[1,32], index: 19, kind: input, shape index: {}]
  %s20 = inlined_call_operand.hbm [shape: f32[1,32], index: 20, kind: input, shape index: {}]
  %s21 = inlined_call_operand.hbm [shape: f32[1,32], index: 21, kind: input, shape index: {}]
  %s22 = inlined_call_operand.hbm [shape: f32[2,8,32], index: 22, kind: output, shape index: {}]
  %s23 = sld [smem:[#allocation0]]
  $region209: #{tpu_custom_call.1} parent=0
    _
  %s25 = ssub.s32 1, %s23
  %s26 = scalar_select 0, %s25, %s23
  $region1: #{tpu_custom_call.1} parent=0
    #allocation2 [shape = 'u8[8192]{0}', space=vmem, size = 0x2000, scoped, tag = 'input window, operand 0']
    #allocation3 [shape = 's32[2]{0}', space=sflag, size = 0x8, scoped, tag = 'scoped memory for tpu_custom_call.1']
    #allocation4 [shape = 's32[2]{0}', space=sflag, size = 0x8, scoped, tag = 'scoped memory for tpu_custom_call.1']
    #allocation5 [shape = 'u8[8192]{0}', space=vmem, size = 0x2000, scoped, tag = 'input window, operand 1']
    #allocation6 [shape = 's32[2]{0}', space=sflag, size = 0x8, scoped, tag = 'scoped memory for tpu_custom_call.1']
    #allocation7 [shape = 'u8[32768]{0}', space=vmem, size = 0x8000, scoped, tag = 'input window, operand 2']
    #allocation8 [shape = 'u8[8192]{0}', space=vmem, size = 0x2000, scoped, tag = 'input window, operand 3']
    #allocation9 [shape = 's32[2]{0}', space=sflag, size = 0x8, scoped, tag = 'scoped memory for tpu_custom_call.1']
    #allocation10 [shape = 'u8[8192]{0}', space=vmem, size = 0x2000, scoped, tag = 'input window, operand 4']
    #allocation11 [shape = 'u8[8192]{0}', space=vmem, size = 0x2000, scoped, tag = 'input window, operand 5']
    #allocation12 [shape = 's32[2]{0}', space=sflag, size = 0x8, scoped, tag = 'scoped memory for tpu_custom_call.1']
    #allocation13 [shape = 'u8[8192]{0}', space=vmem, size = 0x2000, scoped, tag = 'input window, operand 6, single buffered']
    #allocation14 [shape = 'u8[8192]{0}', space=vmem, size = 0x2000, scoped, tag = 'input window, operand 7, single buffered']
    #allocation15 [shape = 's32[1]{0}', space=sflag, size = 0x4, scoped, tag = 'scoped memory for tpu_custom_call.1']
    #allocation16 [shape = 'u8[8192]{0}', space=vmem, size = 0x2000, scoped, tag = 'input window, operand 8, single buffered']
    #allocation17 [shape = 'u8[512]{0}', space=vmem, size = 0x400, scoped, tag = 'input window, operand 9, single buffered']
    #allocation18 [shape = 's32[1]{0}', space=sflag, size = 0x4, scoped, tag = 'scoped memory for tpu_custom_call.1']
    #allocation19 [shape = 'u8[8192]{0}', space=vmem, size = 0x2000, scoped, tag = 'input window, operand 10, single buffered']
    #allocation20 [shape = 'u8[512]{0}', space=vmem, size = 0x400, scoped, tag = 'input window, operand 11, single buffered']
    #allocation21 [shape = 's32[1]{0}', space=sflag, size = 0x4, scoped, tag = 'scoped memory for tpu_custom_call.1']
    #allocation22 [shape = 'u8[8192]{0}', space=vmem, size = 0x2000, scoped, tag = 'input window, operand 12, single buffered']
    #allocation23 [shape = 'u8[512]{0}', space=vmem, size = 0x400, scoped, tag = 'input window, operand 13, single buffered']
    #allocation24 [shape = 's32[1]{0}', space=sflag, size = 0x4, scoped, tag = 'scoped memory for tpu_custom_call.1']
    #allocation25 [shape = 'u8[8192]{0}', space=vmem, size = 0x2000, scoped, tag = 'input window, operand 14, single buffered']
    #allocation26 [shape = 'u8[512]{0}', space=vmem, size = 0x400, scoped, tag = 'input window, operand 15, single buffered']
    #allocation27 [shape = 's32[1]{0}', space=sflag, size = 0x4, scoped, tag = 'scoped memory for tpu_custom_call.1']
    #allocation28 [shape = 'u8[32768]{0}', space=vmem, size = 0x8000, scoped, tag = 'input window, operand 16, single buffered']
    #allocation29 [shape = 'u8[512]{0}', space=vmem, size = 0x400, scoped, tag = 'input window, operand 17, single buffered']
    #allocation30 [shape = 's32[1]{0}', space=sflag, size = 0x4, scoped, tag = 'scoped memory for tpu_custom_call.1']
    #allocation31 [shape = 'u8[512]{0}', space=vmem, size = 0x400, scoped, tag = 'input window, operand 18, single buffered']
    #allocation32 [shape = 'u8[512]{0}', space=vmem, size = 0x400, scoped, tag = 'input window, operand 19, single buffered']
    #allocation33 [shape = 's32[1]{0}', space=sflag, size = 0x4, scoped, tag = 'scoped memory for tpu_custom_call.1']
    #allocation34 [shape = 'u8[512]{0}', space=vmem, size = 0x400, scoped, tag = 'input window, operand 20, single buffered']
    #allocation35 [shape = 'u8[512]{0}', space=vmem, size = 0x400, scoped, tag = 'input window, operand 21, single buffered']
    #allocation36 [shape = 's32[1]{0}', space=sflag, size = 0x4, scoped, tag = 'scoped memory for tpu_custom_call.1']
    #allocation37 [shape = 'u8[8192]{0}', space=vmem, size = 0x2000, scoped, tag = 'output window, operand 0']
    %27 = vsyncpa [#allocation3], 0
    %s28 = scalar_lea.sflag [#allocation3], 1
    %29 = vsyncpa %s28, 0
    %30 = vsyncpa [#allocation6], 0
    %s31 = scalar_lea.sflag [#allocation6], 1
    %32 = vsyncpa %s31, 0
    %33 = vsyncpa [#allocation9], 0
    %s34 = scalar_lea.sflag [#allocation9], 1
    %35 = vsyncpa %s34, 0
    %36 = vsyncpa [#allocation12], 0
    %s37 = scalar_lea.sflag [#allocation12], 1
    %38 = vsyncpa %s37, 0
    %39 = vsyncpa [#allocation15], 0
    %40 = vsyncpa [#allocation18], 0
    %41 = vsyncpa [#allocation21], 0
    %42 = vsyncpa [#allocation24], 0
    %43 = vsyncpa [#allocation27], 0
    %44 = vsyncpa [#allocation30], 0
    %45 = vsyncpa [#allocation33], 0
    %46 = vsyncpa [#allocation36], 0
    %47 = vsyncpa [#allocation4], 0
    %s48 = scalar_lea.sflag [#allocation4], 1
    %49 = vsyncpa %s48, 0
    loop: start=0, step=1, limit=4
    $region2: #{tpu_custom_call.1} parent=1 // loop_pre_header
      _
    $region3: #{tpu_custom_call.1} parent=1 // loop_header
      %s51 = sphi 0, %s55
      %p52 = scmp.ge.s32.totalorder %s51, 4
      %s58 = sphi 0, %s70
      %s59 = sphi 0, %s66
      %s60 = sphi 0, %s58
      %s61 = sphi 0, %s59
      %s62 = sphi 0, %s60
      %s63 = sphi 0, %s61
      %s75 = sphi 0, %s77
      %s78 = sphi 0, %s75
      %s79 = sphi 0, %s78
      %s95 = sphi 0, %s79
      %s101 = sphi 0, %s103
      %s104 = sphi 0, %s101
      %s105 = sphi 0, %s104
      %s121 = sphi 0, %s105
      %s129 = sphi 0, %s131
      %s132 = sphi 0, %s129
      %s133 = sphi 0, %s132
      %s149 = sphi 0, %s133
      %s157 = sphi 0, %s159
      %s160 = sphi 0, %s157
      %s161 = sphi 0, %s160
      %s177 = sphi 0, %s161
      %s185 = sphi 0, %s187
      %s188 = sphi 0, %s185
      %s189 = sphi 0, %s188
      %s205 = sphi 0, %s189
      %s213 = sphi 0, %s215
      %s216 = sphi 0, %s213
      %s217 = sphi 0, %s216
      %s233 = sphi 0, %s217
      %s237 = sphi 0, %s237
      %s239 = sphi 0, %s237
      %s240 = sphi 0, %s239
      %s254 = sphi 0, %s240
      %s258 = sphi 0, %s258
      %s260 = sphi 0, %s258
      %s261 = sphi 0, %s260
      %s275 = sphi 0, %s261
      %s279 = sphi 0, %s279
      %s281 = sphi 0, %s279
      %s282 = sphi 0, %s281
      %s296 = sphi 0, %s282
      %s300 = sphi 0, %s300
      %s302 = sphi 0, %s300
      %s303 = sphi 0, %s302
      %s317 = sphi 0, %s303
      %s321 = sphi 0, %s321
      %s323 = sphi 0, %s321
      %s324 = sphi 0, %s323
      %s338 = sphi 0, %s324
      %s342 = sphi 0, %s342
      %s344 = sphi 0, %s342
      %s345 = sphi 0, %s344
      %s359 = sphi 0, %s345
      %s363 = sphi 0, %s363
      %s365 = sphi 0, %s363
      %s366 = sphi 0, %s365
      %s380 = sphi 0, %s366
      %s384 = sphi 0, %s384
      %s386 = sphi 0, %s384
      %s387 = sphi 0, %s386
      %s401 = sphi 0, %s387
      %s405 = sphi 0, %s405
      %s407 = sphi 0, %s405
      %s408 = sphi 0, %s407
      %s422 = sphi 0, %s408
      %s426 = sphi 0, %s426
      %s428 = sphi 0, %s426
      %s429 = sphi 0, %s428
      %s443 = sphi 0, %s429
      %s447 = sphi 0, %s447
      %s449 = sphi 0, %s447
      %s450 = sphi 0, %s449
      %s464 = sphi 0, %s450
      %s468 = sphi 0, %s468
      %s470 = sphi 0, %s468
      %s471 = sphi 0, %s470
      %s485 = sphi 0, %s471
      %s489 = sphi 0, %s489
      %s491 = sphi 0, %s489
      %s492 = sphi 0, %s491
      %s506 = sphi 0, %s492
      %s510 = sphi 0, %s510
      %s512 = sphi 0, %s510
      %s513 = sphi 0, %s512
      %s527 = sphi 0, %s513
      %s531 = sphi 0, %s531
      %s533 = sphi 0, %s531
      %s534 = sphi 0, %s533
      %s548 = sphi 0, %s534
      %s552 = sphi 0, %s552
      %s554 = sphi 0, %s552
      %s555 = sphi 0, %s554
      %s569 = sphi 0, %s555
      %s577 = sphi 0, %s579
      %s580 = sphi 0, %s577
      %s581 = sphi 0, %s580
      %s597 = sphi 0, %s581
    $region4: #{tpu_custom_call.1} parent=1 // loop_header_branch
      %54 = sbr.rel (%p52) target = $region8
    $region5: #{tpu_custom_call.1} parent=1 // loop_body
      %s56 = ssub.s32 %s51, 1
      %s57 = ssub.s32 %s51, 2
      %s64 = sadd.s32 1, %s59
      %p65 = scmp.ge.s32.totalorder %s64, 1
      %s66 = scalar_select %p65, 0, %s64
      %s67 = sadd.s32 1, %s58
      %s68 = scalar_select %p65, %s67, %s58
      %p69 = scmp.ge.s32.totalorder %s68, 2
      %s70 = scalar_select %p69, 0, %s68
      %s71 = ssub.s32 %s58, %s70
      %s72 = ssub.s32 %s59, %s66
      %s73 = sor.u32 %s71, %s72
      %p74 = scmp.eq.s32.totalorder %s73, 0
      %s76 = sadd.s32 %s75, 1
      %s77 = scalar_select %p74, %s75, %s76
      %p80 = pneg %p74
      %p81 = scmp.eq.s32.totalorder %s51, 1
      %p82 = por %p80, %p81
      %p83 = scmp.ne.s32.totalorder %s75, %s78
      %p84 = scmp.eq.s32.totalorder %s51, 0
      %p85 = por %p83, %p84
      %p86 = scmp.ne.s32.totalorder %s75, %s78
      %p87 = scmp.eq.s32.totalorder %s56, 1
      %p88 = por %p86, %p87
      %p89 = scmp.ne.s32.totalorder %s78, %s79
      %p90 = scmp.eq.s32.totalorder %s56, 0
      %p91 = por %p89, %p90
      %p92 = scmp.ne.s32.totalorder %s78, %s79
      %p93 = scmp.eq.s32.totalorder %s57, 1
      %p94 = por %p92, %p93
      %p96 = scmp.ne.s32.totalorder %s79, %s95
      %p97 = scmp.eq.s32.totalorder %s57, 0
      %p98 = por %p96, %p97
      %s99 = ssub.s32 %s58, %s70
      %p100 = scmp.eq.s32.totalorder %s99, 0
      %s102 = sadd.s32 %s101, 1
      %s103 = scalar_select %p100, %s101, %s102
      %p106 = pneg %p100
      %p107 = scmp.eq.s32.totalorder %s51, 1
      %p108 = por %p106, %p107
      %p109 = scmp.ne.s32.totalorder %s101, %s104
      %p110 = scmp.eq.s32.totalorder %s51, 0
      %p111 = por %p109, %p110
      %p112 = scmp.ne.s32.totalorder %s101, %s104
      %p113 = scmp.eq.s32.totalorder %s56, 1
      %p114 = por %p112, %p113
      %p115 = scmp.ne.s32.totalorder %s104, %s105
      %p116 = scmp.eq.s32.totalorder %s56, 0
      %p117 = por %p115, %p116
      %p118 = scmp.ne.s32.totalorder %s104, %s105
      %p119 = scmp.eq.s32.totalorder %s57, 1
      %p120 = por %p118, %p119
      %p122 = scmp.ne.s32.totalorder %s105, %s121
      %p123 = scmp.eq.s32.totalorder %s57, 0
      %p124 = por %p122, %p123
      %s125 = ssub.s32 %s58, %s70
      %s126 = ssub.s32 %s59, %s66
      %s127 = sor.u32 %s125, %s126
      %p128 = scmp.eq.s32.totalorder %s127, 0
      %s130 = sadd.s32 %s129, 1
      %s131 = scalar_select %p128, %s129, %s130
      %p134 = pneg %p128
      %p135 = scmp.eq.s32.totalorder %s51, 1
      %p136 = por %p134, %p135
      %p137 = scmp.ne.s32.totalorder %s129, %s132
      %p138 = scmp.eq.s32.totalorder %s51, 0
      %p139 = por %p137, %p138
      %p140 = scmp.ne.s32.totalorder %s129, %s132
      %p141 = scmp.eq.s32.totalorder %s56, 1
      %p142 = por %p140, %p141
      %p143 = scmp.ne.s32.totalorder %s132, %s133
      %p144 = scmp.eq.s32.totalorder %s56, 0
      %p145 = por %p143, %p144
      %p146 = scmp.ne.s32.totalorder %s132, %s133
      %p147 = scmp.eq.s32.totalorder %s57, 1
      %p148 = por %p146, %p147
      %p150 = scmp.ne.s32.totalorder %s133, %s149
      %p151 = scmp.eq.s32.totalorder %s57, 0
      %p152 = por %p150, %p151
      %s153 = ssub.s32 %s58, %s70
      %s154 = ssub.s32 %s59, %s66
      %s155 = sor.u32 %s153, %s154
      %p156 = scmp.eq.s32.totalorder %s155, 0
      %s158 = sadd.s32 %s157, 1
      %s159 = scalar_select %p156, %s157, %s158
      %p162 = pneg %p156
      %p163 = scmp.eq.s32.totalorder %s51, 1
      %p164 = por %p162, %p163
      %p165 = scmp.ne.s32.totalorder %s157, %s160
      %p166 = scmp.eq.s32.totalorder %s51, 0
      %p167 = por %p165, %p166
      %p168 = scmp.ne.s32.totalorder %s157, %s160
      %p169 = scmp.eq.s32.totalorder %s56, 1
      %p170 = por %p168, %p169
      %p171 = scmp.ne.s32.totalorder %s160, %s161
      %p172 = scmp.eq.s32.totalorder %s56, 0
      %p173 = por %p171, %p172
      %p174 = scmp.ne.s32.totalorder %s160, %s161
      %p175 = scmp.eq.s32.totalorder %s57, 1
      %p176 = por %p174, %p175
      %p178 = scmp.ne.s32.totalorder %s161, %s177
      %p179 = scmp.eq.s32.totalorder %s57, 0
      %p180 = por %p178, %p179
      %s181 = ssub.s32 %s58, %s70
      %s182 = ssub.s32 %s59, %s66
      %s183 = sor.u32 %s181, %s182
      %p184 = scmp.eq.s32.totalorder %s183, 0
      %s186 = sadd.s32 %s185, 1
      %s187 = scalar_select %p184, %s185, %s186
      %p190 = pneg %p184
      %p191 = scmp.eq.s32.totalorder %s51, 1
      %p192 = por %p190, %p191
      %p193 = scmp.ne.s32.totalorder %s185, %s188
      %p194 = scmp.eq.s32.totalorder %s51, 0
      %p195 = por %p193, %p194
      %p196 = scmp.ne.s32.totalorder %s185, %s188
      %p197 = scmp.eq.s32.totalorder %s56, 1
      %p198 = por %p196, %p197
      %p199 = scmp.ne.s32.totalorder %s188, %s189
      %p200 = scmp.eq.s32.totalorder %s56, 0
      %p201 = por %p199, %p200
      %p202 = scmp.ne.s32.totalorder %s188, %s189
      %p203 = scmp.eq.s32.totalorder %s57, 1
      %p204 = por %p202, %p203
      %p206 = scmp.ne.s32.totalorder %s189, %s205
      %p207 = scmp.eq.s32.totalorder %s57, 0
      %p208 = por %p206, %p207
      %s209 = ssub.s32 %s58, %s70
      %s210 = ssub.s32 %s59, %s66
      %s211 = sor.u32 %s209, %s210
      %p212 = scmp.eq.s32.totalorder %s211, 0
      %s214 = sadd.s32 %s213, 1
      %s215 = scalar_select %p212, %s213, %s214
      %p218 = pneg %p212
      %p219 = scmp.eq.s32.totalorder %s51, 1
      %p220 = por %p218, %p219
      %p221 = scmp.ne.s32.totalorder %s213, %s216
      %p222 = scmp.eq.s32.totalorder %s51, 0
      %p223 = por %p221, %p222
      %p224 = scmp.ne.s32.totalorder %s213, %s216
      %p225 = scmp.eq.s32.totalorder %s56, 1
      %p226 = por %p224, %p225
      %p227 = scmp.ne.s32.totalorder %s216, %s217
      %p228 = scmp.eq.s32.totalorder %s56, 0
      %p229 = por %p227, %p228
      %p230 = scmp.ne.s32.totalorder %s216, %s217
      %p231 = scmp.eq.s32.totalorder %s57, 1
      %p232 = por %p230, %p231
      %p234 = scmp.ne.s32.totalorder %s217, %s233
      %p235 = scmp.eq.s32.totalorder %s57, 0
      %p236 = por %p234, %p235
      %s238 = sadd.s32 %s237, 1
      %p241 = scmp.eq.s32.totalorder %s51, 1
      %p242 = scmp.ne.s32.totalorder %s237, %s239
      %p243 = scmp.eq.s32.totalorder %s51, 0
      %p244 = por %p242, %p243
      %p245 = scmp.ne.s32.totalorder %s237, %s239
      %p246 = scmp.eq.s32.totalorder %s56, 1
      %p247 = por %p245, %p246
      %p248 = scmp.ne.s32.totalorder %s239, %s240
      %p249 = scmp.eq.s32.totalorder %s56, 0
      %p250 = por %p248, %p249
      %p251 = scmp.ne.s32.totalorder %s239, %s240
      %p252 = scmp.eq.s32.totalorder %s57, 1
      %p253 = por %p251, %p252
      %p255 = scmp.ne.s32.totalorder %s240, %s254
      %p256 = scmp.eq.s32.totalorder %s57, 0
      %p257 = por %p255, %p256
      %s259 = sadd.s32 %s258, 1
      %p262 = scmp.eq.s32.totalorder %s51, 1
      %p263 = scmp.ne.s32.totalorder %s258, %s260
      %p264 = scmp.eq.s32.totalorder %s51, 0
      %p265 = por %p263, %p264
      %p266 = scmp.ne.s32.totalorder %s258, %s260
      %p267 = scmp.eq.s32.totalorder %s56, 1
      %p268 = por %p266, %p267
      %p269 = scmp.ne.s32.totalorder %s260, %s261
      %p270 = scmp.eq.s32.totalorder %s56, 0
      %p271 = por %p269, %p270
      %p272 = scmp.ne.s32.totalorder %s260, %s261
      %p273 = scmp.eq.s32.totalorder %s57, 1
      %p274 = por %p272, %p273
      %p276 = scmp.ne.s32.totalorder %s261, %s275
      %p277 = scmp.eq.s32.totalorder %s57, 0
      %p278 = por %p276, %p277
      %s280 = sadd.s32 %s279, 1
      %p283 = scmp.eq.s32.totalorder %s51, 1
      %p284 = scmp.ne.s32.totalorder %s279, %s281
      %p285 = scmp.eq.s32.totalorder %s51, 0
      %p286 = por %p284, %p285
      %p287 = scmp.ne.s32.totalorder %s279, %s281
      %p288 = scmp.eq.s32.totalorder %s56, 1
      %p289 = por %p287, %p288
      %p290 = scmp.ne.s32.totalorder %s281, %s282
      %p291 = scmp.eq.s32.totalorder %s56, 0
      %p292 = por %p290, %p291
      %p293 = scmp.ne.s32.totalorder %s281, %s282
      %p294 = scmp.eq.s32.totalorder %s57, 1
      %p295 = por %p293, %p294
      %p297 = scmp.ne.s32.totalorder %s282, %s296
      %p298 = scmp.eq.s32.totalorder %s57, 0
      %p299 = por %p297, %p298
      %s301 = sadd.s32 %s300, 1
      %p304 = scmp.eq.s32.totalorder %s51, 1
      %p305 = scmp.ne.s32.totalorder %s300, %s302
      %p306 = scmp.eq.s32.totalorder %s51, 0
      %p307 = por %p305, %p306
      %p308 = scmp.ne.s32.totalorder %s300, %s302
      %p309 = scmp.eq.s32.totalorder %s56, 1
      %p310 = por %p308, %p309
      %p311 = scmp.ne.s32.totalorder %s302, %s303
      %p312 = scmp.eq.s32.totalorder %s56, 0
      %p313 = por %p311, %p312
      %p314 = scmp.ne.s32.totalorder %s302, %s303
      %p315 = scmp.eq.s32.totalorder %s57, 1
      %p316 = por %p314, %p315
      %p318 = scmp.ne.s32.totalorder %s303, %s317
      %p319 = scmp.eq.s32.totalorder %s57, 0
      %p320 = por %p318, %p319
      %s322 = sadd.s32 %s321, 1
      %p325 = scmp.eq.s32.totalorder %s51, 1
      %p326 = scmp.ne.s32.totalorder %s321, %s323
      %p327 = scmp.eq.s32.totalorder %s51, 0
      %p328 = por %p326, %p327
      %p329 = scmp.ne.s32.totalorder %s321, %s323
      %p330 = scmp.eq.s32.totalorder %s56, 1
      %p331 = por %p329, %p330
      %p332 = scmp.ne.s32.totalorder %s323, %s324
      %p333 = scmp.eq.s32.totalorder %s56, 0
      %p334 = por %p332, %p333
      %p335 = scmp.ne.s32.totalorder %s323, %s324
      %p336 = scmp.eq.s32.totalorder %s57, 1
      %p337 = por %p335, %p336
      %p339 = scmp.ne.s32.totalorder %s324, %s338
      %p340 = scmp.eq.s32.totalorder %s57, 0
      %p341 = por %p339, %p340
      %s343 = sadd.s32 %s342, 1
      %p346 = scmp.eq.s32.totalorder %s51, 1
      %p347 = scmp.ne.s32.totalorder %s342, %s344
      %p348 = scmp.eq.s32.totalorder %s51, 0
      %p349 = por %p347, %p348
      %p350 = scmp.ne.s32.totalorder %s342, %s344
      %p351 = scmp.eq.s32.totalorder %s56, 1
      %p352 = por %p350, %p351
      %p353 = scmp.ne.s32.totalorder %s344, %s345
      %p354 = scmp.eq.s32.totalorder %s56, 0
      %p355 = por %p353, %p354
      %p356 = scmp.ne.s32.totalorder %s344, %s345
      %p357 = scmp.eq.s32.totalorder %s57, 1
      %p358 = por %p356, %p357
      %p360 = scmp.ne.s32.totalorder %s345, %s359
      %p361 = scmp.eq.s32.totalorder %s57, 0
      %p362 = por %p360, %p361
      %s364 = sadd.s32 %s363, 1
      %p367 = scmp.eq.s32.totalorder %s51, 1
      %p368 = scmp.ne.s32.totalorder %s363, %s365
      %p369 = scmp.eq.s32.totalorder %s51, 0
      %p370 = por %p368, %p369
      %p371 = scmp.ne.s32.totalorder %s363, %s365
      %p372 = scmp.eq.s32.totalorder %s56, 1
      %p373 = por %p371, %p372
      %p374 = scmp.ne.s32.totalorder %s365, %s366
      %p375 = scmp.eq.s32.totalorder %s56, 0
      %p376 = por %p374, %p375
      %p377 = scmp.ne.s32.totalorder %s365, %s366
      %p378 = scmp.eq.s32.totalorder %s57, 1
      %p379 = por %p377, %p378
      %p381 = scmp.ne.s32.totalorder %s366, %s380
      %p382 = scmp.eq.s32.totalorder %s57, 0
      %p383 = por %p381, %p382
      %s385 = sadd.s32 %s384, 1
      %p388 = scmp.eq.s32.totalorder %s51, 1
      %p389 = scmp.ne.s32.totalorder %s384, %s386
      %p390 = scmp.eq.s32.totalorder %s51, 0
      %p391 = por %p389, %p390
      %p392 = scmp.ne.s32.totalorder %s384, %s386
      %p393 = scmp.eq.s32.totalorder %s56, 1
      %p394 = por %p392, %p393
      %p395 = scmp.ne.s32.totalorder %s386, %s387
      %p396 = scmp.eq.s32.totalorder %s56, 0
      %p397 = por %p395, %p396
      %p398 = scmp.ne.s32.totalorder %s386, %s387
      %p399 = scmp.eq.s32.totalorder %s57, 1
      %p400 = por %p398, %p399
      %p402 = scmp.ne.s32.totalorder %s387, %s401
      %p403 = scmp.eq.s32.totalorder %s57, 0
      %p404 = por %p402, %p403
      %s406 = sadd.s32 %s405, 1
      %p409 = scmp.eq.s32.totalorder %s51, 1
      %p410 = scmp.ne.s32.totalorder %s405, %s407
      %p411 = scmp.eq.s32.totalorder %s51, 0
      %p412 = por %p410, %p411
      %p413 = scmp.ne.s32.totalorder %s405, %s407
      %p414 = scmp.eq.s32.totalorder %s56, 1
      %p415 = por %p413, %p414
      %p416 = scmp.ne.s32.totalorder %s407, %s408
      %p417 = scmp.eq.s32.totalorder %s56, 0
      %p418 = por %p416, %p417
      %p419 = scmp.ne.s32.totalorder %s407, %s408
      %p420 = scmp.eq.s32.totalorder %s57, 1
      %p421 = por %p419, %p420
      %p423 = scmp.ne.s32.totalorder %s408, %s422
      %p424 = scmp.eq.s32.totalorder %s57, 0
      %p425 = por %p423, %p424
      %s427 = sadd.s32 %s426, 1
      %p430 = scmp.eq.s32.totalorder %s51, 1
      %p431 = scmp.ne.s32.totalorder %s426, %s428
      %p432 = scmp.eq.s32.totalorder %s51, 0
      %p433 = por %p431, %p432
      %p434 = scmp.ne.s32.totalorder %s426, %s428
      %p435 = scmp.eq.s32.totalorder %s56, 1
      %p436 = por %p434, %p435
      %p437 = scmp.ne.s32.totalorder %s428, %s429
      %p438 = scmp.eq.s32.totalorder %s56, 0
      %p439 = por %p437, %p438
      %p440 = scmp.ne.s32.totalorder %s428, %s429
      %p441 = scmp.eq.s32.totalorder %s57, 1
      %p442 = por %p440, %p441
      %p444 = scmp.ne.s32.totalorder %s429, %s443
      %p445 = scmp.eq.s32.totalorder %s57, 0
      %p446 = por %p444, %p445
      %s448 = sadd.s32 %s447, 1
      %p451 = scmp.eq.s32.totalorder %s51, 1
      %p452 = scmp.ne.s32.totalorder %s447, %s449
      %p453 = scmp.eq.s32.totalorder %s51, 0
      %p454 = por %p452, %p453
      %p455 = scmp.ne.s32.totalorder %s447, %s449
      %p456 = scmp.eq.s32.totalorder %s56, 1
      %p457 = por %p455, %p456
      %p458 = scmp.ne.s32.totalorder %s449, %s450
      %p459 = scmp.eq.s32.totalorder %s56, 0
      %p460 = por %p458, %p459
      %p461 = scmp.ne.s32.totalorder %s449, %s450
      %p462 = scmp.eq.s32.totalorder %s57, 1
      %p463 = por %p461, %p462
      %p465 = scmp.ne.s32.totalorder %s450, %s464
      %p466 = scmp.eq.s32.totalorder %s57, 0
      %p467 = por %p465, %p466
      %s469 = sadd.s32 %s468, 1
      %p472 = scmp.eq.s32.totalorder %s51, 1
      %p473 = scmp.ne.s32.totalorder %s468, %s470
      %p474 = scmp.eq.s32.totalorder %s51, 0
      %p475 = por %p473, %p474
      %p476 = scmp.ne.s32.totalorder %s468, %s470
      %p477 = scmp.eq.s32.totalorder %s56, 1
      %p478 = por %p476, %p477
      %p479 = scmp.ne.s32.totalorder %s470, %s471
      %p480 = scmp.eq.s32.totalorder %s56, 0
      %p481 = por %p479, %p480
      %p482 = scmp.ne.s32.totalorder %s470, %s471
      %p483 = scmp.eq.s32.totalorder %s57, 1
      %p484 = por %p482, %p483
      %p486 = scmp.ne.s32.totalorder %s471, %s485
      %p487 = scmp.eq.s32.totalorder %s57, 0
      %p488 = por %p486, %p487
      %s490 = sadd.s32 %s489, 1
      %p493 = scmp.eq.s32.totalorder %s51, 1
      %p494 = scmp.ne.s32.totalorder %s489, %s491
      %p495 = scmp.eq.s32.totalorder %s51, 0
      %p496 = por %p494, %p495
      %p497 = scmp.ne.s32.totalorder %s489, %s491
      %p498 = scmp.eq.s32.totalorder %s56, 1
      %p499 = por %p497, %p498
      %p500 = scmp.ne.s32.totalorder %s491, %s492
      %p501 = scmp.eq.s32.totalorder %s56, 0
      %p502 = por %p500, %p501
      %p503 = scmp.ne.s32.totalorder %s491, %s492
      %p504 = scmp.eq.s32.totalorder %s57, 1
      %p505 = por %p503, %p504
      %p507 = scmp.ne.s32.totalorder %s492, %s506
      %p508 = scmp.eq.s32.totalorder %s57, 0
      %p509 = por %p507, %p508
      %s511 = sadd.s32 %s510, 1
      %p514 = scmp.eq.s32.totalorder %s51, 1
      %p515 = scmp.ne.s32.totalorder %s510, %s512
      %p516 = scmp.eq.s32.totalorder %s51, 0
      %p517 = por %p515, %p516
      %p518 = scmp.ne.s32.totalorder %s510, %s512
      %p519 = scmp.eq.s32.totalorder %s56, 1
      %p520 = por %p518, %p519
      %p521 = scmp.ne.s32.totalorder %s512, %s513
      %p522 = scmp.eq.s32.totalorder %s56, 0
      %p523 = por %p521, %p522
      %p524 = scmp.ne.s32.totalorder %s512, %s513
      %p525 = scmp.eq.s32.totalorder %s57, 1
      %p526 = por %p524, %p525
      %p528 = scmp.ne.s32.totalorder %s513, %s527
      %p529 = scmp.eq.s32.totalorder %s57, 0
      %p530 = por %p528, %p529
      %s532 = sadd.s32 %s531, 1
      %p535 = scmp.eq.s32.totalorder %s51, 1
      %p536 = scmp.ne.s32.totalorder %s531, %s533
      %p537 = scmp.eq.s32.totalorder %s51, 0
      %p538 = por %p536, %p537
      %p539 = scmp.ne.s32.totalorder %s531, %s533
      %p540 = scmp.eq.s32.totalorder %s56, 1
      %p541 = por %p539, %p540
      %p542 = scmp.ne.s32.totalorder %s533, %s534
      %p543 = scmp.eq.s32.totalorder %s56, 0
      %p544 = por %p542, %p543
      %p545 = scmp.ne.s32.totalorder %s533, %s534
      %p546 = scmp.eq.s32.totalorder %s57, 1
      %p547 = por %p545, %p546
      %p549 = scmp.ne.s32.totalorder %s534, %s548
      %p550 = scmp.eq.s32.totalorder %s57, 0
      %p551 = por %p549, %p550
      %s553 = sadd.s32 %s552, 1
      %p556 = scmp.eq.s32.totalorder %s51, 1
      %p557 = scmp.ne.s32.totalorder %s552, %s554
      %p558 = scmp.eq.s32.totalorder %s51, 0
      %p559 = por %p557, %p558
      %p560 = scmp.ne.s32.totalorder %s552, %s554
      %p561 = scmp.eq.s32.totalorder %s56, 1
      %p562 = por %p560, %p561
      %p563 = scmp.ne.s32.totalorder %s554, %s555
      %p564 = scmp.eq.s32.totalorder %s56, 0
      %p565 = por %p563, %p564
      %p566 = scmp.ne.s32.totalorder %s554, %s555
      %p567 = scmp.eq.s32.totalorder %s57, 1
      %p568 = por %p566, %p567
      %p570 = scmp.ne.s32.totalorder %s555, %s569
      %p571 = scmp.eq.s32.totalorder %s57, 0
      %p572 = por %p570, %p571
      %s573 = ssub.s32 %s58, %s70
      %s574 = ssub.s32 %s59, %s66
      %s575 = sor.u32 %s573, %s574
      %p576 = scmp.eq.s32.totalorder %s575, 0
      %s578 = sadd.s32 %s577, 1
      %s579 = scalar_select %p576, %s577, %s578
      %p582 = pneg %p576
      %p583 = scmp.eq.s32.totalorder %s51, 1
      %p584 = por %p582, %p583
      %p585 = scmp.ne.s32.totalorder %s577, %s580
      %p586 = scmp.eq.s32.totalorder %s51, 0
      %p587 = por %p585, %p586
      %p588 = scmp.ne.s32.totalorder %s577, %s580
      %p589 = scmp.eq.s32.totalorder %s56, 1
      %p590 = por %p588, %p589
      %p591 = scmp.ne.s32.totalorder %s580, %s581
      %p592 = scmp.eq.s32.totalorder %s56, 0
      %p593 = por %p591, %p592
      %p594 = scmp.ne.s32.totalorder %s580, %s581
      %p595 = scmp.eq.s32.totalorder %s57, 1
      %p596 = por %p594, %p595
      %p598 = scmp.ne.s32.totalorder %s581, %s597
      %p599 = scmp.eq.s32.totalorder %s57, 0
      %p600 = por %p598, %p599
      %p601 = scmp.le.s32.totalorder 1, %s51
      %p602 = scmp.lt.s32.totalorder %s51, 3
      %p603 = pnand %p601, %p602
      %p604 = pneg %p603
      // Predicated region
      $region9: #{tpu_custom_call.1} parent=5 // pred_check
        _
      $region10: #{tpu_custom_call.1} parent=5 // pred_check_branch
        %606 = sbr.rel (%p603) target = $region12
      $region11: #{tpu_custom_call.1} parent=5 // pred_region
        %s607 = ssub.s32 %s51, 1
        // Predicated region
        $region13: #{tpu_custom_call.1} parent=11 // pred_check
          %p608 = pneg %p250
        $region14: #{tpu_custom_call.1} parent=11 // pred_check_branch
          %610 = sbr.rel (%p608) target = $region16
        $region15: #{tpu_custom_call.1} parent=11 // pred_region
          %s612 = ssub.s32 256, 256
          %613 = vsyncadd [#allocation12], %s612
          %s614 = sshll.u32 [#allocation13], 4
          %s615 = int_to_ptr.vmem [resolvable:$true] %s614
          %620 = dma.hbm_to_vmem [thread:$0]  %s6, 256, %s615, [#allocation12], 64, 64, 4
        $region16: #{tpu_custom_call.1} parent=11 // pred_fallthru
          _
        // Predicated region
        $region17: #{tpu_custom_call.1} parent=11 // pred_check
          %p621 = pneg %p271
        $region18: #{tpu_custom_call.1} parent=11 // pred_check_branch
          %623 = sbr.rel (%p621) target = $region20
        $region19: #{tpu_custom_call.1} parent=11 // pred_region
          %s625 = ssub.s32 256, 256
          %626 = vsyncadd [#allocation15], %s625
          %s627 = sshll.u32 [#allocation14], 4
          %s628 = int_to_ptr.vmem [resolvable:$true] %s627
          %633 = dma.hbm_to_vmem [thread:$0]  %s7, 256, %s628, [#allocation15], 64, 64, 4
        $region20: #{tpu_custom_call.1} parent=11 // pred_fallthru
          _
        // Predicated region
        $region21: #{tpu_custom_call.1} parent=11 // pred_check
          %p634 = pneg %p292
        $region22: #{tpu_custom_call.1} parent=11 // pred_check_branch
          %636 = sbr.rel (%p634) target = $region24
        $region23: #{tpu_custom_call.1} parent=11 // pred_region
          %s638 = ssub.s32 256, 256
          %639 = vsyncadd [#allocation15], %s638
          %s640 = sshll.u32 [#allocation16], 4
          %s641 = int_to_ptr.vmem [resolvable:$true] %s640
          %646 = dma.hbm_to_vmem [thread:$0]  %s8, 256, %s641, [#allocation15], 64, 64, 4
        $region24: #{tpu_custom_call.1} parent=11 // pred_fallthru
          _
        // Predicated region
        $region25: #{tpu_custom_call.1} parent=11 // pred_check
          %p647 = pneg %p313
        $region26: #{tpu_custom_call.1} parent=11 // pred_check_branch
          %649 = sbr.rel (%p647) target = $region28
        $region27: #{tpu_custom_call.1} parent=11 // pred_region
          %s651 = ssub.s32 16, 16
          %652 = vsyncadd [#allocation18], %s651
          %s654 = sshll.u32 [#allocation17], 4
          %s655 = int_to_ptr.vmem [resolvable:$true] %s654
          %657 = dma.hbm_to_vmem [thread:$0]  %s9, 16, %s655, [#allocation18]
        $region28: #{tpu_custom_call.1} parent=11 // pred_fallthru
          _
        // Predicated region
        $region29: #{tpu_custom_call.1} parent=11 // pred_check
          %p658 = pneg %p334
        $region30: #{tpu_custom_call.1} parent=11 // pred_check_branch
          %660 = sbr.rel (%p658) target = $region32
        $region31: #{tpu_custom_call.1} parent=11 // pred_region
          %s662 = ssub.s32 256, 256
          %663 = vsyncadd [#allocation18], %s662
          %s664 = sshll.u32 [#allocation19], 4
          %s665 = int_to_ptr.vmem [resolvable:$true] %s664
          %670 = dma.hbm_to_vmem [thread:$0]  %s10, 256, %s665, [#allocation18], 64, 64, 4
        $region32: #{tpu_custom_call.1} parent=11 // pred_fallthru
          _
        // Predicated region
        $region33: #{tpu_custom_call.1} parent=11 // pred_check
          %p671 = pneg %p355
        $region34: #{tpu_custom_call.1} parent=11 // pred_check_branch
          %673 = sbr.rel (%p671) target = $region36
        $region35: #{tpu_custom_call.1} parent=11 // pred_region
          %s675 = ssub.s32 16, 16
          %676 = vsyncadd [#allocation21], %s675
          %s678 = sshll.u32 [#allocation20], 4
          %s679 = int_to_ptr.vmem [resolvable:$true] %s678
          %681 = dma.hbm_to_vmem [thread:$0]  %s11, 16, %s679, [#allocation21]
        $region36: #{tpu_custom_call.1} parent=11 // pred_fallthru
          _
        // Predicated region
        $region37: #{tpu_custom_call.1} parent=11 // pred_check
          %p682 = pneg %p376
        $region38: #{tpu_custom_call.1} parent=11 // pred_check_branch
          %684 = sbr.rel (%p682) target = $region40
        $region39: #{tpu_custom_call.1} parent=11 // pred_region
          %s686 = ssub.s32 256, 256
          %687 = vsyncadd [#allocation21], %s686
          %s688 = sshll.u32 [#allocation22], 4
          %s689 = int_to_ptr.vmem [resolvable:$true] %s688
          %694 = dma.hbm_to_vmem [thread:$0]  %s12, 256, %s689, [#allocation21], 64, 64, 4
        $region40: #{tpu_custom_call.1} parent=11 // pred_fallthru
          _
        // Predicated region
        $region41: #{tpu_custom_call.1} parent=11 // pred_check
          %p695 = pneg %p397
        $region42: #{tpu_custom_call.1} parent=11 // pred_check_branch
          %697 = sbr.rel (%p695) target = $region44
        $region43: #{tpu_custom_call.1} parent=11 // pred_region
          %s699 = ssub.s32 16, 16
          %700 = vsyncadd [#allocation24], %s699
          %s702 = sshll.u32 [#allocation23], 4
          %s703 = int_to_ptr.vmem [resolvable:$true] %s702
          %705 = dma.hbm_to_vmem [thread:$0]  %s13, 16, %s703, [#allocation24]
        $region44: #{tpu_custom_call.1} parent=11 // pred_fallthru
          _
        // Predicated region
        $region45: #{tpu_custom_call.1} parent=11 // pred_check
          %p706 = pneg %p418
        $region46: #{tpu_custom_call.1} parent=11 // pred_check_branch
          %708 = sbr.rel (%p706) target = $region48
        $region47: #{tpu_custom_call.1} parent=11 // pred_region
          %s710 = ssub.s32 256, 256
          %711 = vsyncadd [#allocation24], %s710
          %s712 = sshll.u32 [#allocation25], 4
          %s713 = int_to_ptr.vmem [resolvable:$true] %s712
          %718 = dma.hbm_to_vmem [thread:$0]  %s14, 256, %s713, [#allocation24], 64, 64, 4
        $region48: #{tpu_custom_call.1} parent=11 // pred_fallthru
          _
        // Predicated region
        $region49: #{tpu_custom_call.1} parent=11 // pred_check
          %p719 = pneg %p439
        $region50: #{tpu_custom_call.1} parent=11 // pred_check_branch
          %721 = sbr.rel (%p719) target = $region52
        $region51: #{tpu_custom_call.1} parent=11 // pred_region
          %s723 = ssub.s32 16, 16
          %724 = vsyncadd [#allocation27], %s723
          %s726 = sshll.u32 [#allocation26], 4
          %s727 = int_to_ptr.vmem [resolvable:$true] %s726
          %729 = dma.hbm_to_vmem [thread:$0]  %s15, 16, %s727, [#allocation27]
        $region52: #{tpu_custom_call.1} parent=11 // pred_fallthru
          _
        // Predicated region
        $region53: #{tpu_custom_call.1} parent=11 // pred_check
          %p730 = pneg %p460
        $region54: #{tpu_custom_call.1} parent=11 // pred_check_branch
          %732 = sbr.rel (%p730) target = $region56
        $region55: #{tpu_custom_call.1} parent=11 // pred_region
          %s734 = ssub.s32 1024, 1024
          %735 = vsyncadd [#allocation27], %s734
          %s736 = sshll.u32 [#allocation28], 4
          %s737 = int_to_ptr.vmem [resolvable:$true] %s736
          %742 = dma.hbm_to_vmem [thread:$0]  %s16, 1024, %s737, [#allocation27], 64, 64, 4
        $region56: #{tpu_custom_call.1} parent=11 // pred_fallthru
          _
        // Predicated region
        $region57: #{tpu_custom_call.1} parent=11 // pred_check
          %p743 = pneg %p481
        $region58: #{tpu_custom_call.1} parent=11 // pred_check_branch
          %745 = sbr.rel (%p743) target = $region60
        $region59: #{tpu_custom_call.1} parent=11 // pred_region
          %s747 = ssub.s32 16, 16
          %748 = vsyncadd [#allocation30], %s747
          %s750 = sshll.u32 [#allocation29], 4
          %s751 = int_to_ptr.vmem [resolvable:$true] %s750
          %753 = dma.hbm_to_vmem [thread:$0]  %s17, 16, %s751, [#allocation30]
        $region60: #{tpu_custom_call.1} parent=11 // pred_fallthru
          _
        // Predicated region
        $region61: #{tpu_custom_call.1} parent=11 // pred_check
          %p754 = pneg %p502
        $region62: #{tpu_custom_call.1} parent=11 // pred_check_branch
          %756 = sbr.rel (%p754) target = $region64
        $region63: #{tpu_custom_call.1} parent=11 // pred_region
          %s758 = ssub.s32 16, 16
          %759 = vsyncadd [#allocation30], %s758
          %s761 = sshll.u32 [#allocation31], 4
          %s762 = int_to_ptr.vmem [resolvable:$true] %s761
          %764 = dma.hbm_to_vmem [thread:$0]  %s18, 16, %s762, [#allocation30]
        $region64: #{tpu_custom_call.1} parent=11 // pred_fallthru
          _
        // Predicated region
        $region65: #{tpu_custom_call.1} parent=11 // pred_check
          %p765 = pneg %p523
        $region66: #{tpu_custom_call.1} parent=11 // pred_check_branch
          %767 = sbr.rel (%p765) target = $region68
        $region67: #{tpu_custom_call.1} parent=11 // pred_region
          %s769 = ssub.s32 16, 16
          %770 = vsyncadd [#allocation33], %s769
          %s772 = sshll.u32 [#allocation32], 4
          %s773 = int_to_ptr.vmem [resolvable:$true] %s772
          %775 = dma.hbm_to_vmem [thread:$0]  %s19, 16, %s773, [#allocation33]
        $region68: #{tpu_custom_call.1} parent=11 // pred_fallthru
          _
        // Predicated region
        $region69: #{tpu_custom_call.1} parent=11 // pred_check
          %p776 = pneg %p544
        $region70: #{tpu_custom_call.1} parent=11 // pred_check_branch
          %778 = sbr.rel (%p776) target = $region72
        $region71: #{tpu_custom_call.1} parent=11 // pred_region
          %s780 = ssub.s32 16, 16
          %781 = vsyncadd [#allocation33], %s780
          %s783 = sshll.u32 [#allocation34], 4
          %s784 = int_to_ptr.vmem [resolvable:$true] %s783
          %786 = dma.hbm_to_vmem [thread:$0]  %s20, 16, %s784, [#allocation33]
        $region72: #{tpu_custom_call.1} parent=11 // pred_fallthru
          _
        // Predicated region
        $region73: #{tpu_custom_call.1} parent=11 // pred_check
          %p787 = pneg %p565
        $region74: #{tpu_custom_call.1} parent=11 // pred_check_branch
          %789 = sbr.rel (%p787) target = $region76
        $region75: #{tpu_custom_call.1} parent=11 // pred_region
          %s791 = ssub.s32 16, 16
          %792 = vsyncadd [#allocation36], %s791
          %s794 = sshll.u32 [#allocation35], 4
          %s795 = int_to_ptr.vmem [resolvable:$true] %s794
          %797 = dma.hbm_to_vmem [thread:$0]  %s21, 16, %s795, [#allocation36]
        $region76: #{tpu_custom_call.1} parent=11 // pred_fallthru
          _
      $region12: #{tpu_custom_call.1} parent=5 // pred_fallthru
        _
      %p798 = scmp.lt.s32.totalorder %s51, 2
      // Predicated region
      $region77: #{tpu_custom_call.1} parent=5 // pred_check
        %p799 = pneg %p798
      $region78: #{tpu_custom_call.1} parent=5 // pred_check_branch
        %801 = sbr.rel (%p799) target = $region80
      $region79: #{tpu_custom_call.1} parent=5 // pred_region
        // Predicated region
        $region81: #{tpu_custom_call.1} parent=79 // pred_check
          %p802 = pneg %p85
        $region82: #{tpu_custom_call.1} parent=79 // pred_check_branch
          %804 = sbr.rel (%p802) target = $region84
        $region83: #{tpu_custom_call.1} parent=79 // pred_region
          %s805 = sand.u32 %s75, 1
          %s806 = scalar_lea.sflag [#allocation3], %s805
          %s807 = sand.u32 %s75, 1
          %s808 = smul.addr %s807, 8
          %s809 = scalar_lea.vmem [#allocation2], %s808
          %s811 = ssub.s32 128, 128
          %812 = vsyncadd %s806, %s811
          %s813 = sadd.s32 %s59, %s58
          %s814 = smul.addr %s813, 128
          %s815 = scalar_lea.hbm %s0, %s814
          %s817 = sshll.u32 %s809, 4
          %s818 = int_to_ptr.vmem [resolvable:$true] %s817
          %820 = dma.hbm_to_vmem [thread:$0]  %s815, 128, %s818, %s806
        $region84: #{tpu_custom_call.1} parent=79 // pred_fallthru
          _
        // Predicated region
        $region85: #{tpu_custom_call.1} parent=79 // pred_check
          %p821 = pneg %p111
        $region86: #{tpu_custom_call.1} parent=79 // pred_check_branch
          %823 = sbr.rel (%p821) target = $region88
        $region87: #{tpu_custom_call.1} parent=79 // pred_region
          %s824 = sand.u32 %s51, 1
          %s825 = scalar_lea.sflag [#allocation6], %s824
          %s826 = sand.u32 %s101, 1
          %s827 = smul.addr %s826, 8
          %s828 = scalar_lea.vmem [#allocation5], %s827
          %s830 = ssub.s32 128, 128
          %831 = vsyncadd %s825, %s830
          %s832 = smul.addr %s58, 128
          %s833 = scalar_lea.hbm %s1, %s832
          %s835 = sshll.u32 %s828, 4
          %s836 = int_to_ptr.vmem [resolvable:$true] %s835
          %838 = dma.hbm_to_vmem [thread:$0]  %s833, 128, %s836, %s825
        $region88: #{tpu_custom_call.1} parent=79 // pred_fallthru
          _
        // Predicated region
        $region89: #{tpu_custom_call.1} parent=79 // pred_check
          %p839 = pneg %p139
        $region90: #{tpu_custom_call.1} parent=79 // pred_check_branch
          %841 = sbr.rel (%p839) target = $region92
        $region91: #{tpu_custom_call.1} parent=79 // pred_region
          %s842 = sand.u32 %s51, 1
          %s843 = scalar_lea.sflag [#allocation6], %s842
          %s844 = sand.u32 %s129, 1
          %s845 = smul.addr %s844, 32
          %s846 = scalar_lea.vmem [#allocation7], %s845
          %s847 = smul.u32 8, %s59
          %s849 = ssub.s32 512, 512
          %850 = vsyncadd %s843, %s849
          %s851 = smul.addr %s58, 8
          %s852 = sadd.s32 %s847, %s851
          %s853 = smul.addr %s852, 64
          %s854 = scalar_lea.hbm %s2, %s853
          %s855 = sshll.u32 %s846, 4
          %s856 = int_to_ptr.vmem [resolvable:$true] %s855
          %861 = dma.hbm_to_vmem [thread:$0]  %s854, 512, %s856, %s843, 64, 64, 4
        $region92: #{tpu_custom_call.1} parent=79 // pred_fallthru
          _
        // Predicated region
        $region93: #{tpu_custom_call.1} parent=79 // pred_check
          %p862 = pneg %p167
        $region94: #{tpu_custom_call.1} parent=79 // pred_check_branch
          %864 = sbr.rel (%p862) target = $region96
        $region95: #{tpu_custom_call.1} parent=79 // pred_region
          %s865 = sand.u32 %s51, 1
          %s866 = scalar_lea.sflag [#allocation9], %s865
          %s867 = sand.u32 %s157, 1
          %s868 = smul.addr %s867, 8
          %s869 = scalar_lea.vmem [#allocation8], %s868
          %s871 = ssub.s32 128, 128
          %872 = vsyncadd %s866, %s871
          %s873 = sadd.s32 %s59, %s58
          %s874 = smul.addr %s873, 128
          %s875 = scalar_lea.hbm %s3, %s874
          %s877 = sshll.u32 %s869, 4
          %s878 = int_to_ptr.vmem [resolvable:$true] %s877
          %880 = dma.hbm_to_vmem [thread:$0]  %s875, 128, %s878, %s866
        $region96: #{tpu_custom_call.1} parent=79 // pred_fallthru
          _
        // Predicated region
        $region97: #{tpu_custom_call.1} parent=79 // pred_check
          %p881 = pneg %p195
        $region98: #{tpu_custom_call.1} parent=79 // pred_check_branch
          %883 = sbr.rel (%p881) target = $region100
        $region99: #{tpu_custom_call.1} parent=79 // pred_region
          %s884 = sand.u32 %s51, 1
          %s885 = scalar_lea.sflag [#allocation9], %s884
          %s886 = sand.u32 %s185, 1
          %s887 = smul.addr %s886, 8
          %s888 = scalar_lea.vmem [#allocation10], %s887
          %s890 = ssub.s32 128, 128
          %891 = vsyncadd %s885, %s890
          %s892 = sadd.s32 %s59, %s58
          %s893 = smul.addr %s892, 128
          %s894 = scalar_lea.hbm %s4, %s893
          %s896 = sshll.u32 %s888, 4
          %s897 = int_to_ptr.vmem [resolvable:$true] %s896
          %899 = dma.hbm_to_vmem [thread:$0]  %s894, 128, %s897, %s885
        $region100: #{tpu_custom_call.1} parent=79 // pred_fallthru
          _
        // Predicated region
        $region101: #{tpu_custom_call.1} parent=79 // pred_check
          %p900 = pneg %p223
        $region102: #{tpu_custom_call.1} parent=79 // pred_check_branch
          %902 = sbr.rel (%p900) target = $region104
        $region103: #{tpu_custom_call.1} parent=79 // pred_region
          %s903 = sand.u32 %s51, 1
          %s904 = scalar_lea.sflag [#allocation12], %s903
          %s905 = sand.u32 %s213, 1
          %s906 = smul.addr %s905, 8
          %s907 = scalar_lea.vmem [#allocation11], %s906
          %s909 = ssub.s32 128, 128
          %910 = vsyncadd %s904, %s909
          %s911 = sadd.s32 %s59, %s58
          %s912 = smul.addr %s911, 128
          %s913 = scalar_lea.hbm %s5, %s912
          %s915 = sshll.u32 %s907, 4
          %s916 = int_to_ptr.vmem [resolvable:$true] %s915
          %918 = dma.hbm_to_vmem [thread:$0]  %s913, 128, %s916, %s904
        $region104: #{tpu_custom_call.1} parent=79 // pred_fallthru
          _
      $region80: #{tpu_custom_call.1} parent=5 // pred_fallthru
        _
      %p919 = scmp.le.s32.totalorder 1, %s51
      %p920 = scmp.lt.s32.totalorder %s51, 3
      %p921 = pnand %p919, %p920
      %p922 = pneg %p921
      // Predicated region
      $region105: #{tpu_custom_call.1} parent=5 // pred_check
        _
      $region106: #{tpu_custom_call.1} parent=5 // pred_check_branch
        %924 = sbr.rel (%p921) target = $region108
      $region107: #{tpu_custom_call.1} parent=5 // pred_region
        %s925 = ssub.s32 %s51, 1
        %s926 = sand.u32 %s78, 1
        %s927 = scalar_lea.sflag [#allocation3], %s926
        %s928 = sand.u32 %s78, 1
        %s929 = smul.addr %s928, 8
        %s930 = scalar_lea.vmem [#allocation2], %s929
        // Predicated region
        $region109: #{tpu_custom_call.1} parent=107 // pred_check
          %p931 = pneg %p91
        $region110: #{tpu_custom_call.1} parent=107 // pred_check_branch
          %933 = sbr.rel (%p931) target = $region112
        $region111: #{tpu_custom_call.1} parent=107 // pred_region
          %934 = dma.done %s927, 128
        $region112: #{tpu_custom_call.1} parent=107 // pred_fallthru
          _
        %s935 = sand.u32 %s56, 1
        %s936 = scalar_lea.sflag [#allocation6], %s935
        %s937 = sand.u32 %s104, 1
        %s938 = smul.addr %s937, 8
        %s939 = scalar_lea.vmem [#allocation5], %s938
        // Predicated region
        $region113: #{tpu_custom_call.1} parent=107 // pred_check
          %p940 = pneg %p117
        $region114: #{tpu_custom_call.1} parent=107 // pred_check_branch
          %942 = sbr.rel (%p940) target = $region116
        $region115: #{tpu_custom_call.1} parent=107 // pred_region
          %943 = dma.done %s936, 128
        $region116: #{tpu_custom_call.1} parent=107 // pred_fallthru
          _
        %s944 = sand.u32 %s56, 1
        %s945 = scalar_lea.sflag [#allocation6], %s944
        %s946 = sand.u32 %s132, 1
        %s947 = smul.addr %s946, 32
        %s948 = scalar_lea.vmem [#allocation7], %s947
        // Predicated region
        $region117: #{tpu_custom_call.1} parent=107 // pred_check
          %p949 = pneg %p145
        $region118: #{tpu_custom_call.1} parent=107 // pred_check_branch
          %951 = sbr.rel (%p949) target = $region120
        $region119: #{tpu_custom_call.1} parent=107 // pred_region
          %952 = dma.done %s945, 512
        $region120: #{tpu_custom_call.1} parent=107 // pred_fallthru
          _
        %s953 = sand.u32 %s56, 1
        %s954 = scalar_lea.sflag [#allocation9], %s953
        %s955 = sand.u32 %s160, 1
        %s956 = smul.addr %s955, 8
        %s957 = scalar_lea.vmem [#allocation8], %s956
        // Predicated region
        $region121: #{tpu_custom_call.1} parent=107 // pred_check
          %p958 = pneg %p173
        $region122: #{tpu_custom_call.1} parent=107 // pred_check_branch
          %960 = sbr.rel (%p958) target = $region124
        $region123: #{tpu_custom_call.1} parent=107 // pred_region
          %961 = dma.done %s954, 128
        $region124: #{tpu_custom_call.1} parent=107 // pred_fallthru
          _
        %s962 = sand.u32 %s56, 1
        %s963 = scalar_lea.sflag [#allocation9], %s962
        %s964 = sand.u32 %s188, 1
        %s965 = smul.addr %s964, 8
        %s966 = scalar_lea.vmem [#allocation10], %s965
        // Predicated region
        $region125: #{tpu_custom_call.1} parent=107 // pred_check
          %p967 = pneg %p201
        $region126: #{tpu_custom_call.1} parent=107 // pred_check_branch
          %969 = sbr.rel (%p967) target = $region128
        $region127: #{tpu_custom_call.1} parent=107 // pred_region
          %970 = dma.done %s963, 128
        $region128: #{tpu_custom_call.1} parent=107 // pred_fallthru
          _
        %s971 = sand.u32 %s56, 1
        %s972 = scalar_lea.sflag [#allocation12], %s971
        %s973 = sand.u32 %s216, 1
        %s974 = smul.addr %s973, 8
        %s975 = scalar_lea.vmem [#allocation11], %s974
        // Predicated region
        $region129: #{tpu_custom_call.1} parent=107 // pred_check
          %p976 = pneg %p229
        $region130: #{tpu_custom_call.1} parent=107 // pred_check_branch
          %978 = sbr.rel (%p976) target = $region132
        $region131: #{tpu_custom_call.1} parent=107 // pred_region
          %979 = dma.done %s972, 128
        $region132: #{tpu_custom_call.1} parent=107 // pred_fallthru
          _
        // Predicated region
        $region133: #{tpu_custom_call.1} parent=107 // pred_check
          %p980 = pneg %p250
        $region134: #{tpu_custom_call.1} parent=107 // pred_check_branch
          %982 = sbr.rel (%p980) target = $region136
        $region135: #{tpu_custom_call.1} parent=107 // pred_region
          %983 = dma.done [#allocation12], 256
        $region136: #{tpu_custom_call.1} parent=107 // pred_fallthru
          _
        // Predicated region
        $region137: #{tpu_custom_call.1} parent=107 // pred_check
          %p984 = pneg %p271
        $region138: #{tpu_custom_call.1} parent=107 // pred_check_branch
          %986 = sbr.rel (%p984) target = $region140
        $region139: #{tpu_custom_call.1} parent=107 // pred_region
          %987 = dma.done [#allocation15], 256
        $region140: #{tpu_custom_call.1} parent=107 // pred_fallthru
          _
        // Predicated region
        $region141: #{tpu_custom_call.1} parent=107 // pred_check
          %p988 = pneg %p292
        $region142: #{tpu_custom_call.1} parent=107 // pred_check_branch
          %990 = sbr.rel (%p988) target = $region144
        $region143: #{tpu_custom_call.1} parent=107 // pred_region
          %991 = dma.done [#allocation15], 256
        $region144: #{tpu_custom_call.1} parent=107 // pred_fallthru
          _
        // Predicated region
        $region145: #{tpu_custom_call.1} parent=107 // pred_check
          %p992 = pneg %p313
        $region146: #{tpu_custom_call.1} parent=107 // pred_check_branch
          %994 = sbr.rel (%p992) target = $region148
        $region147: #{tpu_custom_call.1} parent=107 // pred_region
          %995 = dma.done [#allocation18], 16
        $region148: #{tpu_custom_call.1} parent=107 // pred_fallthru
          _
        // Predicated region
        $region149: #{tpu_custom_call.1} parent=107 // pred_check
          %p996 = pneg %p334
        $region150: #{tpu_custom_call.1} parent=107 // pred_check_branch
          %998 = sbr.rel (%p996) target = $region152
        $region151: #{tpu_custom_call.1} parent=107 // pred_region
          %999 = dma.done [#allocation18], 256
        $region152: #{tpu_custom_call.1} parent=107 // pred_fallthru
          _
        // Predicated region
        $region153: #{tpu_custom_call.1} parent=107 // pred_check
          %p1000 = pneg %p355
        $region154: #{tpu_custom_call.1} parent=107 // pred_check_branch
          %1002 = sbr.rel (%p1000) target = $region156
        $region155: #{tpu_custom_call.1} parent=107 // pred_region
          %1003 = dma.done [#allocation21], 16
        $region156: #{tpu_custom_call.1} parent=107 // pred_fallthru
          _
        // Predicated region
        $region157: #{tpu_custom_call.1} parent=107 // pred_check
          %p1004 = pneg %p376
        $region158: #{tpu_custom_call.1} parent=107 // pred_check_branch
          %1006 = sbr.rel (%p1004) target = $region160
        $region159: #{tpu_custom_call.1} parent=107 // pred_region
          %1007 = dma.done [#allocation21], 256
        $region160: #{tpu_custom_call.1} parent=107 // pred_fallthru
          _
        // Predicated region
        $region161: #{tpu_custom_call.1} parent=107 // pred_check
          %p1008 = pneg %p397
        $region162: #{tpu_custom_call.1} parent=107 // pred_check_branch
          %1010 = sbr.rel (%p1008) target = $region164
        $region163: #{tpu_custom_call.1} parent=107 // pred_region
          %1011 = dma.done [#allocation24], 16
        $region164: #{tpu_custom_call.1} parent=107 // pred_fallthru
          _
        // Predicated region
        $region165: #{tpu_custom_call.1} parent=107 // pred_check
          %p1012 = pneg %p418
        $region166: #{tpu_custom_call.1} parent=107 // pred_check_branch
          %1014 = sbr.rel (%p1012) target = $region168
        $region167: #{tpu_custom_call.1} parent=107 // pred_region
          %1015 = dma.done [#allocation24], 256
        $region168: #{tpu_custom_call.1} parent=107 // pred_fallthru
          _
        // Predicated region
        $region169: #{tpu_custom_call.1} parent=107 // pred_check
          %p1016 = pneg %p439
        $region170: #{tpu_custom_call.1} parent=107 // pred_check_branch
          %1018 = sbr.rel (%p1016) target = $region172
        $region171: #{tpu_custom_call.1} parent=107 // pred_region
          %1019 = dma.done [#allocation27], 16
        $region172: #{tpu_custom_call.1} parent=107 // pred_fallthru
          _
        // Predicated region
        $region173: #{tpu_custom_call.1} parent=107 // pred_check
          %p1020 = pneg %p460
        $region174: #{tpu_custom_call.1} parent=107 // pred_check_branch
          %1022 = sbr.rel (%p1020) target = $region176
        $region175: #{tpu_custom_call.1} parent=107 // pred_region
          %1023 = dma.done [#allocation27], 1024
        $region176: #{tpu_custom_call.1} parent=107 // pred_fallthru
          _
        // Predicated region
        $region177: #{tpu_custom_call.1} parent=107 // pred_check
          %p1024 = pneg %p481
        $region178: #{tpu_custom_call.1} parent=107 // pred_check_branch
          %1026 = sbr.rel (%p1024) target = $region180
        $region179: #{tpu_custom_call.1} parent=107 // pred_region
          %1027 = dma.done [#allocation30], 16
        $region180: #{tpu_custom_call.1} parent=107 // pred_fallthru
          _
        // Predicated region
        $region181: #{tpu_custom_call.1} parent=107 // pred_check
          %p1028 = pneg %p502
        $region182: #{tpu_custom_call.1} parent=107 // pred_check_branch
          %1030 = sbr.rel (%p1028) target = $region184
        $region183: #{tpu_custom_call.1} parent=107 // pred_region
          %1031 = dma.done [#allocation30], 16
        $region184: #{tpu_custom_call.1} parent=107 // pred_fallthru
          _
        // Predicated region
        $region185: #{tpu_custom_call.1} parent=107 // pred_check
          %p1032 = pneg %p523
        $region186: #{tpu_custom_call.1} parent=107 // pred_check_branch
          %1034 = sbr.rel (%p1032) target = $region188
        $region187: #{tpu_custom_call.1} parent=107 // pred_region
          %1035 = dma.done [#allocation33], 16
        $region188: #{tpu_custom_call.1} parent=107 // pred_fallthru
          _
        // Predicated region
        $region189: #{tpu_custom_call.1} parent=107 // pred_check
          %p1036 = pneg %p544
        $region190: #{tpu_custom_call.1} parent=107 // pred_check_branch
          %1038 = sbr.rel (%p1036) target = $region192
        $region191: #{tpu_custom_call.1} parent=107 // pred_region
          %1039 = dma.done [#allocation33], 16
        $region192: #{tpu_custom_call.1} parent=107 // pred_fallthru
          _
        // Predicated region
        $region193: #{tpu_custom_call.1} parent=107 // pred_check
          %p1040 = pneg %p565
        $region194: #{tpu_custom_call.1} parent=107 // pred_check_branch
          %1042 = sbr.rel (%p1040) target = $region196
        $region195: #{tpu_custom_call.1} parent=107 // pred_region
          %1043 = dma.done [#allocation36], 16
        $region196: #{tpu_custom_call.1} parent=107 // pred_fallthru
          _
        %s1044 = sand.u32 %s78, 1
        %s1045 = scalar_lea.sflag [#allocation3], %s1044
        %s1046 = sand.u32 %s78, 1
        %s1047 = smul.addr %s1046, 8
        %s1048 = scalar_lea.vmem [#allocation2], %s1047
        %p1049 = pneg %p91
        %p1050 = pneg %p88
        %s1051 = sand.u32 %s56, 1
        %s1052 = scalar_lea.sflag [#allocation6], %s1051
        %s1053 = sand.u32 %s104, 1
        %s1054 = smul.addr %s1053, 8
        %s1055 = scalar_lea.vmem [#allocation5], %s1054
        %p1056 = pneg %p117
        %p1057 = pneg %p114
        %s1058 = sand.u32 %s56, 1
        %s1059 = scalar_lea.sflag [#allocation6], %s1058
        %s1060 = sand.u32 %s132, 1
        %s1061 = smul.addr %s1060, 32
        %s1062 = scalar_lea.vmem [#allocation7], %s1061
        %p1063 = pneg %p145
        %p1064 = pneg %p142
        %s1065 = sand.u32 %s56, 1
        %s1066 = scalar_lea.sflag [#allocation9], %s1065
        %s1067 = sand.u32 %s160, 1
        %s1068 = smul.addr %s1067, 8
        %s1069 = scalar_lea.vmem [#allocation8], %s1068
        %p1070 = pneg %p173
        %p1071 = pneg %p170
        %s1072 = sand.u32 %s56, 1
        %s1073 = scalar_lea.sflag [#allocation9], %s1072
        %s1074 = sand.u32 %s188, 1
        %s1075 = smul.addr %s1074, 8
        %s1076 = scalar_lea.vmem [#allocation10], %s1075
        %p1077 = pneg %p201
        %p1078 = pneg %p198
        %s1079 = sand.u32 %s56, 1
        %s1080 = scalar_lea.sflag [#allocation12], %s1079
        %s1081 = sand.u32 %s216, 1
        %s1082 = smul.addr %s1081, 8
        %s1083 = scalar_lea.vmem [#allocation11], %s1082
        %p1084 = pneg %p229
        %p1085 = pneg %p226
        %p1086 = pneg %p250
        %p1087 = pneg %p247
        %p1088 = pneg %p271
        %p1089 = pneg %p268
        %p1090 = pneg %p292
        %p1091 = pneg %p289
        %p1092 = pneg %p313
        %p1093 = pneg %p310
        %p1094 = pneg %p334
        %p1095 = pneg %p331
        %p1096 = pneg %p355
        %p1097 = pneg %p352
        %p1098 = pneg %p376
        %p1099 = pneg %p373
        %p1100 = pneg %p397
        %p1101 = pneg %p394
        %p1102 = pneg %p418
        %p1103 = pneg %p415
        %p1104 = pneg %p439
        %p1105 = pneg %p436
        %p1106 = pneg %p460
        %p1107 = pneg %p457
        %p1108 = pneg %p481
        %p1109 = pneg %p478
        %p1110 = pneg %p502
        %p1111 = pneg %p499
        %p1112 = pneg %p523
        %p1113 = pneg %p520
        %p1114 = pneg %p544
        %p1115 = pneg %p541
        %p1116 = pneg %p565
        %p1117 = pneg %p562
        %p1118 = pneg %p593
        %p1119 = pneg %p590
        %s1120 = sand.u32 %s580, 1
        %s1121 = scalar_lea.sflag [#allocation4], %s1120
        %s1122 = sand.u32 %s580, 1
        %s1123 = smul.addr %s1122, 8
        %s1124 = scalar_lea.vmem [#allocation37], %s1123
        %s1125 = smul.u32 8, %s61
        %v1127 = vld [vmem:[%s930] sm:$0xff]
        %v1128 = vld [vmem:[%s939] sm:$0xff]
        %v1129 = vld [vmem:[%s948] sm:$0xf]
        %v1130 = vld [vmem:[%s948 + $0x4] sm:$0xf]
        %v1131 = vld [vmem:[%s948 + $0x8] sm:$0xf]
        %v1132 = vld [vmem:[%s948 + $0xc] sm:$0xf]
        %v1133 = vld [vmem:[%s948 + $0x10] sm:$0xf]
        %v1134 = vld [vmem:[%s948 + $0x14] sm:$0xf]
        %v1135 = vld [vmem:[%s948 + $0x18] sm:$0xf]
        %v1136 = vld [vmem:[%s948 + $0x1c] sm:$0xf]
        %v1137 = vld [vmem:[%s957] sm:$0xff]
        %v1138 = vld [vmem:[%s966] sm:$0xff]
        %v1139 = vld [vmem:[%s975] sm:$0xff]
        %v1140 = vld [vmem:[#allocation13] sm:$0xf]
        %v1141 = vld [vmem:[#allocation13 + $0x4] sm:$0xf]
        %v1142 = vld [vmem:[#allocation13 + $0x8] sm:$0xf]
        %v1143 = vld [vmem:[#allocation13 + $0xc] sm:$0xf]
        %v1144 = vld [vmem:[#allocation14] sm:$0xf]
        %v1145 = vld [vmem:[#allocation14 + $0x4] sm:$0xf]
        %v1146 = vld [vmem:[#allocation14 + $0x8] sm:$0xf]
        %v1147 = vld [vmem:[#allocation14 + $0xc] sm:$0xf]
        %v1148 = vld [vmem:[#allocation16] sm:$0xf]
        %v1149 = vld [vmem:[#allocation16 + $0x4] sm:$0xf]
        %v1150 = vld [vmem:[#allocation16 + $0x8] sm:$0xf]
        %v1151 = vld [vmem:[#allocation16 + $0xc] sm:$0xf]
        %v1152 = vld [vmem:[#allocation17] sm:$0x1]
        %v1153 = vld [vmem:[#allocation19] sm:$0xf]
        %v1154 = vld [vmem:[#allocation19 + $0x4] sm:$0xf]
        %v1155 = vld [vmem:[#allocation19 + $0x8] sm:$0xf]
        %v1156 = vld [vmem:[#allocation19 + $0xc] sm:$0xf]
        %v1157 = vld [vmem:[#allocation20] sm:$0x1]
        %v1158 = vld [vmem:[#allocation22] sm:$0xf]
        %v1159 = vld [vmem:[#allocation22 + $0x4] sm:$0xf]
        %v1160 = vld [vmem:[#allocation22 + $0x8] sm:$0xf]
        %v1161 = vld [vmem:[#allocation22 + $0xc] sm:$0xf]
        %v1162 = vld [vmem:[#allocation23] sm:$0x1]
        %v1163 = vpack.c.bf16 %v1127, %v1127
        %v1168 = vunpack.c.l.b16 %v1140
        %v1169 = vunpack.c.l.b16 %v1141
        %v1170 = vunpack.c.l.b16 %v1142
        %v1171 = vunpack.c.l.b16 %v1143
        %v1172 = vpack.c.b16 %v1169, %v1168
        %v1173 = vpack.c.b16 %v1171, %v1170
        %vm1176 = vcmask 261120
        %v1178 = vsel %vm1176, %v1163, 0
        %1180 = vmatprep.subr.bf16.mxu0 0
        %1181 = vmatpush1.bf16.msra.mxu0 %v1172
        %1182 = vmatprep.subr.bf16.mxu0 0
        %1183 = vmatpush1.bf16.msra.mxu0 %v1173
        %1184 = vmatprep.subr.bf16.mxu0 0
        %1185 = vmatpush1.bf16.msra.mxu0 0
        %1186 = vmatprep.subr.bf16.mxu0 0
        %1187 = vmatpush1.bf16.msra.mxu0 0
        %1188 = vmatprep.subr.bf16.mxu0 0
        %1189 = vmatpush1.bf16.msra.mxu0 0
        %1190 = vmatprep.subr.bf16.mxu0 0
        %1191 = vmatpush1.bf16.msra.mxu0 0
        %1192 = vmatprep.subr.bf16.mxu0 0
        %1193 = vmatpush1.bf16.msra.mxu0 0
        %1194 = vmatprep.subr.bf16.mxu0 0
        %1195 = vmatpush1.bf16.msra.mxu0 0
        %1196 = vmatprep.subr.bf16.mxu0 0
        %1197 = vmatpush1.bf16.msra.mxu0 0
        %1198 = vmatprep.subr.bf16.mxu0 0
        %1199 = vmatpush1.bf16.msra.mxu0 0
        %1200 = vmatprep.subr.bf16.mxu0 0
        %1201 = vmatpush1.bf16.msra.mxu0 0
        %1202 = vmatprep.subr.bf16.mxu0 0
        %1203 = vmatpush1.bf16.msra.mxu0 0
        %1204 = vmatprep.subr.bf16.mxu0 0
        %1205 = vmatpush1.bf16.msra.mxu0 0
        %1206 = vmatprep.subr.bf16.mxu0 0
        %1207 = vmatpush1.bf16.msra.mxu0 0
        %1208 = vmatprep.subr.bf16.mxu0 0
        %1209 = vmatpush1.bf16.msra.mxu0 0
        %1210 = vmatprep.subr.bf16.mxu0 0
        %1211 = vmatpush1.bf16.msra.mxu0 0
        %1212 = vmatprep.mubr.bf16.mxu0 0
        %1213 = vmatmul.mubr.bf16.gmra.mrb[0].mxu0 %v1178
        %v1214 = vpop.f32.mrb[0].mxu0
        %v1215 = vadd.f32 0.0, %v1214
        %v1216 = vpop.f32.mrb[0].mxu0
        %v1217 = vpop.f32.mrb[0].mxu0
        %v1218 = vpop.f32.mrb[0].mxu0
        %1219 = vdwg.mxu0
        %v1220 = vpack.c.bf16 %v1128, %v1128
        %v1225 = vunpack.c.l.b16 %v1148
        %v1226 = vunpack.c.l.b16 %v1149
        %v1227 = vunpack.c.l.b16 %v1150
        %v1228 = vunpack.c.l.b16 %v1151
        %v1229 = vpack.c.b16 %v1226, %v1225
        %v1230 = vpack.c.b16 %v1228, %v1227
        %v1234 = vsel %vm1176, %v1220, 0
        %1236 = vmatprep.subr.bf16.mxu0 0
        %1237 = vmatpush1.bf16.msra.mxu0 %v1229
        %1238 = vmatprep.subr.bf16.mxu0 0
        %1239 = vmatpush1.bf16.msra.mxu0 %v1230
        %1240 = vmatprep.subr.bf16.mxu0 0
        %1241 = vmatpush1.bf16.msra.mxu0 0
        %1242 = vmatprep.subr.bf16.mxu0 0
        %1243 = vmatpush1.bf16.msra.mxu0 0
        %1244 = vmatprep.subr.bf16.mxu0 0
        %1245 = vmatpush1.bf16.msra.mxu0 0
        %1246 = vmatprep.subr.bf16.mxu0 0
        %1247 = vmatpush1.bf16.msra.mxu0 0
        %1248 = vmatprep.subr.bf16.mxu0 0
        %1249 = vmatpush1.bf16.msra.mxu0 0
        %1250 = vmatprep.subr.bf16.mxu0 0
        %1251 = vmatpush1.bf16.msra.mxu0 0
        %1252 = vmatprep.subr.bf16.mxu0 0
        %1253 = vmatpush1.bf16.msra.mxu0 0
        %1254 = vmatprep.subr.bf16.mxu0 0
        %1255 = vmatpush1.bf16.msra.mxu0 0
        %1256 = vmatprep.subr.bf16.mxu0 0
        %1257 = vmatpush1.bf16.msra.mxu0 0
        %1258 = vmatprep.subr.bf16.mxu0 0
        %1259 = vmatpush1.bf16.msra.mxu0 0
        %1260 = vmatprep.subr.bf16.mxu0 0
        %1261 = vmatpush1.bf16.msra.mxu0 0
        %1262 = vmatprep.subr.bf16.mxu0 0
        %1263 = vmatpush1.bf16.msra.mxu0 0
        %1264 = vmatprep.subr.bf16.mxu0 0
        %1265 = vmatpush1.bf16.msra.mxu0 0
        %1266 = vmatprep.subr.bf16.mxu0 0
        %1267 = vmatpush1.bf16.msra.mxu0 0
        %1268 = vmatprep.mubr.bf16.mxu0 0
        %1269 = vmatmul.mubr.bf16.gmra.mrb[0].mxu0 %v1234
        %v1270 = vpop.f32.mrb[0].mxu0
        %v1271 = vadd.f32 0.0, %v1270
        %v1272 = vpop.f32.mrb[0].mxu0
        %v1273 = vpop.f32.mrb[0].mxu0
        %v1274 = vpop.f32.mrb[0].mxu0
        %1275 = vdwg.mxu0
        %v1284 = vcombine.low %v1129, %v1130
        %v1285 = vcombine.low %v1131, %v1132
        %v1286 = vcombine.low %v1133, %v1134
        %v1287 = vcombine.low %v1135, %v1136
        %v1292 = vpack.c.bf16 %v1285, %v1284
        %v1293 = vpack.c.bf16 %v1287, %v1286
        %v1294 = vlaneseq
        %v1295 = vand.u32 %v1294, 127
        %v1296 = vlaneseq
        %v1297 = vshrl.u32 %v1296, 7
        %v1298 = vsub.s32 0, %v1297
        %v1299 = vrot.slane %v1137, %v1298
        %1301 = vbcast.lane.b32.xlu0 %v1299, 256
        %v1302 = vpop.permute.xlu0 %1301
        %v1303 = vlaneseq
        %v1304 = vshrl.u32 %v1303, 7
        %v1305 = vsub.s32 1, %v1304
        %v1306 = vrot.slane %v1137, %v1305
        %1308 = vbcast.lane.b32.xlu0 %v1306, 256
        %v1309 = vpop.permute.xlu0 %1308
        %v1310 = vlaneseq
        %v1311 = vshrl.u32 %v1310, 7
        %v1312 = vsub.s32 2, %v1311
        %v1313 = vrot.slane %v1137, %v1312
        %1315 = vbcast.lane.b32.xlu0 %v1313, 256
        %v1316 = vpop.permute.xlu0 %1315
        %v1317 = vlaneseq
        %v1318 = vshrl.u32 %v1317, 7
        %v1319 = vsub.s32 3, %v1318
        %v1320 = vrot.slane %v1137, %v1319
        %1322 = vbcast.lane.b32.xlu0 %v1320, 256
        %v1323 = vpop.permute.xlu0 %1322
        %v1324 = vlaneseq
        %v1325 = vshrl.u32 %v1324, 7
        %v1326 = vsub.s32 4, %v1325
        %v1327 = vrot.slane %v1137, %v1326
        %1329 = vbcast.lane.b32.xlu0 %v1327, 256
        %v1330 = vpop.permute.xlu0 %1329
        %v1331 = vlaneseq
        %v1332 = vshrl.u32 %v1331, 7
        %v1333 = vsub.s32 5, %v1332
        %v1334 = vrot.slane %v1137, %v1333
        %1336 = vbcast.lane.b32.xlu0 %v1334, 256
        %v1337 = vpop.permute.xlu0 %1336
        %v1338 = vlaneseq
        %v1339 = vshrl.u32 %v1338, 7
        %v1340 = vsub.s32 6, %v1339
        %v1341 = vrot.slane %v1137, %v1340
        %1343 = vbcast.lane.b32.xlu0 %v1341, 256
        %v1344 = vpop.permute.xlu0 %1343
        %v1345 = vlaneseq
        %v1346 = vshrl.u32 %v1345, 7
        %v1347 = vsub.s32 7, %v1346
        %v1348 = vrot.slane %v1137, %v1347
        %1350 = vbcast.lane.b32.xlu0 %v1348, 256
        %v1351 = vpop.permute.xlu0 %1350
        %vm1352 = vcmp.eq.s32.totalorder %v1302, %v1295
        %vm1353 = vcmp.eq.s32.totalorder %v1309, %v1295
        %vm1354 = vcmp.eq.s32.totalorder %v1316, %v1295
        %vm1355 = vcmp.eq.s32.totalorder %v1323, %v1295
        %vm1356 = vcmp.eq.s32.totalorder %v1330, %v1295
        %vm1357 = vcmp.eq.s32.totalorder %v1337, %v1295
        %vm1358 = vcmp.eq.s32.totalorder %v1344, %v1295
        %vm1359 = vcmp.eq.s32.totalorder %v1351, %v1295
        %v1360 = vsel %vm1352, 1, 0
        %v1361 = vsel %vm1353, 1, 0
        %v1362 = vsel %vm1354, 1, 0
        %v1363 = vsel %vm1355, 1, 0
        %v1364 = vsel %vm1356, 1, 0
        %v1365 = vsel %vm1357, 1, 0
        %v1366 = vsel %vm1358, 1, 0
        %v1367 = vsel %vm1359, 1, 0
        %v1368 = vcvt.s32.f32 %v1360
        %v1369 = vcvt.s32.f32 %v1361
        %v1370 = vcvt.s32.f32 %v1362
        %v1371 = vcvt.s32.f32 %v1363
        %v1372 = vcvt.s32.f32 %v1364
        %v1373 = vcvt.s32.f32 %v1365
        %v1374 = vcvt.s32.f32 %v1366
        %v1375 = vcvt.s32.f32 %v1367
        %v1376 = vpack.c.bf16 %v1368, %v1368
        %v1377 = vpack.c.bf16 %v1369, %v1369
        %v1378 = vpack.c.bf16 %v1370, %v1370
        %v1379 = vpack.c.bf16 %v1371, %v1371
        %v1380 = vpack.c.bf16 %v1372, %v1372
        %v1381 = vpack.c.bf16 %v1373, %v1373
        %v1382 = vpack.c.bf16 %v1374, %v1374
        %v1383 = vpack.c.bf16 %v1375, %v1375
        %v1384 = vpack.c.bf16 %v1271, %v1271
        %v1393 = vcombine.low %v1376, %v1377
        %v1394 = vcombine.low %v1378, %v1379
        %v1396 = vunpack.c.l.s4 1983009808
        %v1397 = vunpack.c.0.s8 %v1396
        %v1398 = vlaneseq
        %v1399 = vshrl.u32 %v1398, 7
        %v1400 = vsub.s32 %v1397, %v1399
        %v1401 = vrot.slane %v1393, %v1400
        %v1403 = vunpack.c.l.s4 1983009808
        %v1404 = vunpack.c.0.s8 %v1403
        %v1405 = vlaneseq
        %v1406 = vshrl.u32 %v1405, 7
        %v1407 = vsub.s32 %v1404, %v1406
        %v1408 = vrot.slane %v1394, %v1407
        %v1409 = vcombine.low %v1401, %v1408
        %v1410 = vcombine.low %v1380, %v1381
        %v1411 = vcombine.low %v1382, %v1383
        %v1413 = vunpack.c.l.s4 1983009808
        %v1414 = vunpack.c.0.s8 %v1413
        %v1415 = vlaneseq
        %v1416 = vshrl.u32 %v1415, 7
        %v1417 = vsub.s32 %v1414, %v1416
        %v1418 = vrot.slane %v1410, %v1417
        %v1420 = vunpack.c.l.s4 1983009808
        %v1421 = vunpack.c.0.s8 %v1420
        %v1422 = vlaneseq
        %v1423 = vshrl.u32 %v1422, 7
        %v1424 = vsub.s32 %v1421, %v1423
        %v1425 = vrot.slane %v1411, %v1424
        %v1426 = vcombine.low %v1418, %v1425
        %vm1427 = vcmask 64512
        %v1429 = vsel %vm1427, %v1409, 0
        %v1432 = vsel %vm1427, %v1426, 0
        %vm1434 = vcmask 1043456
        %v1436 = vsel %vm1434, %v1384, 0
        %1438 = vmatprep.subr.bf16.mxu0 0
        %1439 = vmatpush1.bf16.msra.mxu0 %v1436
        %1440 = vmatprep.subr.bf16.mxu0 0
        %1441 = vmatpush1.bf16.msra.mxu0 0
        %1442 = vmatprep.subr.bf16.mxu0 0
        %1443 = vmatpush1.bf16.msra.mxu0 0
        %1444 = vmatprep.subr.bf16.mxu0 0
        %1445 = vmatpush1.bf16.msra.mxu0 0
        %1446 = vmatprep.subr.bf16.mxu0 0
        %1447 = vmatpush1.bf16.msra.mxu0 0
        %1448 = vmatprep.subr.bf16.mxu0 0
        %1449 = vmatpush1.bf16.msra.mxu0 0
        %1450 = vmatprep.subr.bf16.mxu0 0
        %1451 = vmatpush1.bf16.msra.mxu0 0
        %1452 = vmatprep.subr.bf16.mxu0 0
        %1453 = vmatpush1.bf16.msra.mxu0 0
        %1454 = vmatprep.subr.bf16.mxu0 0
        %1455 = vmatpush1.bf16.msra.mxu0 0
        %1456 = vmatprep.subr.bf16.mxu0 0
        %1457 = vmatpush1.bf16.msra.mxu0 0
        %1458 = vmatprep.subr.bf16.mxu0 0
        %1459 = vmatpush1.bf16.msra.mxu0 0
        %1460 = vmatprep.subr.bf16.mxu0 0
        %1461 = vmatpush1.bf16.msra.mxu0 0
        %1462 = vmatprep.subr.bf16.mxu0 0
        %1463 = vmatpush1.bf16.msra.mxu0 0
        %1464 = vmatprep.subr.bf16.mxu0 0
        %1465 = vmatpush1.bf16.msra.mxu0 0
        %1466 = vmatprep.subr.bf16.mxu0 0
        %1467 = vmatpush1.bf16.msra.mxu0 0
        %1468 = vmatprep.subr.bf16.mxu0 0
        %1469 = vmatpush1.bf16.msra.mxu0 0
        %1470 = vmatprep.mubr.bf16.mxu0 0
        %1471 = vmatmul.mubr.bf16.gmra.mrb[0].mxu0 %v1429
        %v1472 = vpop.f32.mrb[0].mxu0
        %v1473 = vadd.f32 0.0, %v1472
        %v1474 = vpop.f32.mrb[0].mxu0
        %v1475 = vpop.f32.mrb[0].mxu0
        %v1476 = vadd.f32 0.0, %v1475
        %v1477 = vpop.f32.mrb[0].mxu0
        %1478 = vmatprep.mubr.bf16.mxu0 0
        %1479 = vmatmul.mubr.bf16.gmra.mrb[0].mxu0 %v1432
        %v1480 = vpop.f32.mrb[0].mxu0
        %v1481 = vadd.f32 0.0, %v1480
        %v1482 = vpop.f32.mrb[0].mxu0
        %v1483 = vpop.f32.mrb[0].mxu0
        %v1484 = vadd.f32 0.0, %v1483
        %v1485 = vpop.f32.mrb[0].mxu0
        %1486 = vdwg.mxu0
        %v1491 = vunpack.c.l.b16 %v1144
        %v1492 = vunpack.c.l.b16 %v1145
        %v1493 = vunpack.c.l.b16 %v1146
        %v1494 = vunpack.c.l.b16 %v1147
        %v1495 = vpack.c.b16 %v1492, %v1491
        %v1496 = vpack.c.b16 %v1494, %v1493
        %v1500 = vsel %vm1176, %v1292, 0
        %v1503 = vsel %vm1176, %v1293, 0
        %1505 = vmatprep.subr.bf16.mxu0 0
        %1506 = vmatpush1.bf16.msra.mxu0 %v1495
        %1507 = vmatprep.subr.bf16.mxu0 0
        %1508 = vmatpush1.bf16.msra.mxu0 %v1496
        %1509 = vmatprep.subr.bf16.mxu0 0
        %1510 = vmatpush1.bf16.msra.mxu0 0
        %1511 = vmatprep.subr.bf16.mxu0 0
        %1512 = vmatpush1.bf16.msra.mxu0 0
        %1513 = vmatprep.subr.bf16.mxu0 0
        %1514 = vmatpush1.bf16.msra.mxu0 0
        %1515 = vmatprep.subr.bf16.mxu0 0
        %1516 = vmatpush1.bf16.msra.mxu0 0
        %1517 = vmatprep.subr.bf16.mxu0 0
        %1518 = vmatpush1.bf16.msra.mxu0 0
        %1519 = vmatprep.subr.bf16.mxu0 0
        %1520 = vmatpush1.bf16.msra.mxu0 0
        %1521 = vmatprep.subr.bf16.mxu0 0
        %1522 = vmatpush1.bf16.msra.mxu0 0
        %1523 = vmatprep.subr.bf16.mxu0 0
        %1524 = vmatpush1.bf16.msra.mxu0 0
        %1525 = vmatprep.subr.bf16.mxu0 0
        %1526 = vmatpush1.bf16.msra.mxu0 0
        %1527 = vmatprep.subr.bf16.mxu0 0
        %1528 = vmatpush1.bf16.msra.mxu0 0
        %1529 = vmatprep.subr.bf16.mxu0 0
        %1530 = vmatpush1.bf16.msra.mxu0 0
        %1531 = vmatprep.subr.bf16.mxu0 0
        %1532 = vmatpush1.bf16.msra.mxu0 0
        %1533 = vmatprep.subr.bf16.mxu0 0
        %1534 = vmatpush1.bf16.msra.mxu0 0
        %1535 = vmatprep.subr.bf16.mxu0 0
        %1536 = vmatpush1.bf16.msra.mxu0 0
        %1537 = vmatprep.mubr.bf16.mxu0 0
        %1538 = vmatmul.mubr.bf16.gmra.mrb[0].mxu0 %v1500
        %v1539 = vpop.f32.mrb[0].mxu0
        %v1540 = vadd.f32 %v1473, %v1539
        %v1541 = vpop.f32.mrb[0].mxu0
        %v1542 = vpop.f32.mrb[0].mxu0
        %v1543 = vadd.f32 %v1476, %v1542
        %v1544 = vpop.f32.mrb[0].mxu0
        %1545 = vmatprep.mubr.bf16.mxu0 0
        %1546 = vmatmul.mubr.bf16.gmra.mrb[0].mxu0 %v1503
        %v1547 = vpop.f32.mrb[0].mxu0
        %v1548 = vadd.f32 %v1481, %v1547
        %v1549 = vpop.f32.mrb[0].mxu0
        %v1550 = vpop.f32.mrb[0].mxu0
        %v1551 = vadd.f32 %v1484, %v1550
        %v1552 = vpop.f32.mrb[0].mxu0
        %1553 = vdwg.mxu0
        %v1558 = vcombine.high %v1540, %v1540
        %v1559 = vcombine.high %v1543, %v1543
        %v1560 = vcombine.high %v1548, %v1548
        %v1561 = vcombine.high %v1551, %v1551
        %v1567 = vcombine.high %v1215, %v1215
        %v1569 = vunpack.c.l.s4 1966171168
        %v1570 = vunpack.c.0.s8 %v1569
        %v1571 = vlaneseq
        %v1572 = vshrl.u32 %v1571, 7
        %v1573 = vsub.s32 %v1570, %v1572
        %v1574 = vrot.slane %v1215, %v1573
        %v1576 = vunpack.c.l.s4 1966171168
        %v1577 = vunpack.c.0.s8 %v1576
        %v1578 = vlaneseq
        %v1579 = vshrl.u32 %v1578, 7
        %v1580 = vsub.s32 %v1577, %v1579
        %v1581 = vrot.slane %v1567, %v1580
        %v1582 = vcombine.high %v1574, %v1574
        %v1583 = vcombine.high %v1581, %v1581
        %v1585 = vunpack.c.l.s4 1966171168
        %v1586 = vunpack.c.0.s8 %v1585
        %v1587 = vlaneseq
        %v1588 = vshrl.u32 %v1587, 7
        %v1589 = vsub.s32 %v1586, %v1588
        %v1590 = vrot.slane %v1574, %v1589
        %v1592 = vunpack.c.l.s4 1966171168
        %v1593 = vunpack.c.0.s8 %v1592
        %v1594 = vlaneseq
        %v1595 = vshrl.u32 %v1594, 7
        %v1596 = vsub.s32 %v1593, %v1595
        %v1597 = vrot.slane %v1581, %v1596
        %v1599 = vunpack.c.l.s4 1966171168
        %v1600 = vunpack.c.0.s8 %v1599
        %v1601 = vlaneseq
        %v1602 = vshrl.u32 %v1601, 7
        %v1603 = vsub.s32 %v1600, %v1602
        %v1604 = vrot.slane %v1582, %v1603
        %v1606 = vunpack.c.l.s4 1966171168
        %v1607 = vunpack.c.0.s8 %v1606
        %v1608 = vlaneseq
        %v1609 = vshrl.u32 %v1608, 7
        %v1610 = vsub.s32 %v1607, %v1609
        %v1611 = vrot.slane %v1583, %v1610
        %v1612 = vcombine.high %v1590, %v1590
        %v1613 = vcombine.high %v1597, %v1597
        %v1614 = vcombine.high %v1604, %v1604
        %v1615 = vcombine.high %v1611, %v1611
        %v1616 = vlaneseq
        %v1617 = vshrl.u32 %v1616, 7
        %v1618 = vsub.s32 0, %v1617
        %v1619 = vrot.slane %v1590, %v1618
        %v1620 = vlaneseq
        %v1621 = vshrl.u32 %v1620, 7
        %v1622 = vsub.s32 0, %v1621
        %v1623 = vrot.slane %v1604, %v1622
        %v1624 = vlaneseq
        %v1625 = vshrl.u32 %v1624, 7
        %v1626 = vsub.s32 0, %v1625
        %v1627 = vrot.slane %v1612, %v1626
        %v1628 = vlaneseq
        %v1629 = vshrl.u32 %v1628, 7
        %v1630 = vsub.s32 0, %v1629
        %v1631 = vrot.slane %v1614, %v1630
        %v1632 = vlaneseq
        %v1633 = vshrl.u32 %v1632, 7
        %v1634 = vsub.s32 0, %v1633
        %v1635 = vrot.slane %v1597, %v1634
        %v1636 = vlaneseq
        %v1637 = vshrl.u32 %v1636, 7
        %v1638 = vsub.s32 0, %v1637
        %v1639 = vrot.slane %v1611, %v1638
        %v1640 = vlaneseq
        %v1641 = vshrl.u32 %v1640, 7
        %v1642 = vsub.s32 0, %v1641
        %v1643 = vrot.slane %v1613, %v1642
        %v1644 = vlaneseq
        %v1645 = vshrl.u32 %v1644, 7
        %v1646 = vsub.s32 0, %v1645
        %v1647 = vrot.slane %v1615, %v1646
        %v1656 = vadd.f32 %v1540, %v1619
        %v1657 = vadd.f32 %v1558, %v1623
        %v1658 = vadd.f32 %v1543, %v1627
        %v1659 = vadd.f32 %v1559, %v1631
        %v1660 = vadd.f32 %v1548, %v1635
        %v1661 = vadd.f32 %v1560, %v1639
        %v1662 = vadd.f32 %v1551, %v1643
        %v1663 = vadd.f32 %v1561, %v1647
        %v1665 = vlaneseq
        %v1666 = vshrl.u32 %v1665, 7
        %v1667 = vsub.s32 0, %v1666
        %v1668 = vrot.slane %v1152, %v1667
        %v1670 = vadd.f32 %v1656, %v1668
        %v1671 = vadd.f32 %v1657, %v1668
        %v1672 = vadd.f32 %v1658, %v1668
        %v1673 = vadd.f32 %v1659, %v1668
        %v1674 = vadd.f32 %v1660, %v1668
        %v1675 = vadd.f32 %v1661, %v1668
        %v1676 = vadd.f32 %v1662, %v1668
        %v1677 = vadd.f32 %v1663, %v1668
        %v1678 = vmul.f32 %v1670, 0.5
        %v1679 = vmul.f32 %v1671, 0.5
        %v1680 = vmul.f32 %v1672, 0.5
        %v1681 = vmul.f32 %v1673, 0.5
        %v1682 = vmul.f32 %v1674, 0.5
        %v1683 = vmul.f32 %v1675, 0.5
        %v1684 = vmul.f32 %v1676, 0.5
        %v1685 = vmul.f32 %v1677, 0.5
        %v1686 = vmul.f32 %v1670, 0.044715
        %v1687 = vmul.f32 %v1671, 0.044715
        %v1688 = vmul.f32 %v1672, 0.044715
        %v1689 = vmul.f32 %v1673, 0.044715
        %v1690 = vmul.f32 %v1674, 0.044715
        %v1691 = vmul.f32 %v1675, 0.044715
        %v1692 = vmul.f32 %v1676, 0.044715
        %v1693 = vmul.f32 %v1677, 0.044715
        %v1694 = vmul.f32 %v1686, %v1670
        %v1695 = vmul.f32 %v1687, %v1671
        %v1696 = vmul.f32 %v1688, %v1672
        %v1697 = vmul.f32 %v1689, %v1673
        %v1698 = vmul.f32 %v1690, %v1674
        %v1699 = vmul.f32 %v1691, %v1675
        %v1700 = vmul.f32 %v1692, %v1676
        %v1701 = vmul.f32 %v1693, %v1677
        %v1702 = vmul.f32 %v1694, %v1670
        %v1703 = vmul.f32 %v1695, %v1671
        %v1704 = vmul.f32 %v1696, %v1672
        %v1705 = vmul.f32 %v1697, %v1673
        %v1706 = vmul.f32 %v1698, %v1674
        %v1707 = vmul.f32 %v1699, %v1675
        %v1708 = vmul.f32 %v1700, %v1676
        %v1709 = vmul.f32 %v1701, %v1677
        %v1710 = vadd.f32 %v1670, %v1702
        %v1711 = vadd.f32 %v1671, %v1703
        %v1712 = vadd.f32 %v1672, %v1704
        %v1713 = vadd.f32 %v1673, %v1705
        %v1714 = vadd.f32 %v1674, %v1706
        %v1715 = vadd.f32 %v1675, %v1707
        %v1716 = vadd.f32 %v1676, %v1708
        %v1717 = vadd.f32 %v1677, %v1709
        %v1718 = vmul.f32 %v1710, 0.7978846
        %v1719 = vmul.f32 %v1711, 0.7978846
        %v1720 = vmul.f32 %v1712, 0.7978846
        %v1721 = vmul.f32 %v1713, 0.7978846
        %v1722 = vmul.f32 %v1714, 0.7978846
        %v1723 = vmul.f32 %v1715, 0.7978846
        %v1724 = vmul.f32 %v1716, 0.7978846
        %v1725 = vmul.f32 %v1717, 0.7978846
        %v1726 = vtanh.pop %v1718
        %v1727 = vtanh.pop %v1719
        %v1728 = vtanh.pop %v1720
        %v1729 = vtanh.pop %v1721
        %v1730 = vtanh.pop %v1722
        %v1731 = vtanh.pop %v1723
        %v1732 = vtanh.pop %v1724
        %v1733 = vtanh.pop %v1725
        %v1734 = vadd.f32 %v1726, 1.0
        %v1735 = vadd.f32 %v1727, 1.0
        %v1736 = vadd.f32 %v1728, 1.0
        %v1737 = vadd.f32 %v1729, 1.0
        %v1738 = vadd.f32 %v1730, 1.0
        %v1739 = vadd.f32 %v1731, 1.0
        %v1740 = vadd.f32 %v1732, 1.0
        %v1741 = vadd.f32 %v1733, 1.0
        %v1742 = vmul.f32 %v1678, %v1734
        %v1743 = vmul.f32 %v1679, %v1735
        %v1744 = vmul.f32 %v1680, %v1736
        %v1745 = vmul.f32 %v1681, %v1737
        %v1746 = vmul.f32 %v1682, %v1738
        %v1747 = vmul.f32 %v1683, %v1739
        %v1748 = vmul.f32 %v1684, %v1740
        %v1749 = vmul.f32 %v1685, %v1741
        %v1758 = vcombine.low %v1742, %v1743
        %v1759 = vcombine.low %v1744, %v1745
        %v1760 = vcombine.low %v1746, %v1747
        %v1761 = vcombine.low %v1748, %v1749
        %v1766 = vpack.c.bf16 %v1759, %v1758
        %v1767 = vpack.c.bf16 %v1761, %v1760
        %v1769 = vlaneseq
        %v1770 = vshrl.u32 %v1769, 7
        %v1771 = vsub.s32 0, %v1770
        %v1772 = vrot.slane %v1157, %v1771
        %v1778 = vunpack.c.l.b16 %v1153
        %v1779 = vunpack.c.l.b16 %v1154
        %v1780 = vunpack.c.l.b16 %v1155
        %v1781 = vunpack.c.l.b16 %v1156
        %v1782 = vpack.c.b16 %v1779, %v1778
        %v1783 = vpack.c.b16 %v1781, %v1780
        %v1787 = vsel %vm1176, %v1766, 0
        %v1790 = vsel %vm1176, %v1767, 0
        %1792 = vmatprep.subr.bf16.mxu0 0
        %1793 = vmatpush1.bf16.msra.mxu0 %v1782
        %1794 = vmatprep.subr.bf16.mxu0 0
        %1795 = vmatpush1.bf16.msra.mxu0 %v1783
        %1796 = vmatprep.subr.bf16.mxu0 0
        %1797 = vmatpush1.bf16.msra.mxu0 0
        %1798 = vmatprep.subr.bf16.mxu0 0
        %1799 = vmatpush1.bf16.msra.mxu0 0
        %1800 = vmatprep.subr.bf16.mxu0 0
        %1801 = vmatpush1.bf16.msra.mxu0 0
        %1802 = vmatprep.subr.bf16.mxu0 0
        %1803 = vmatpush1.bf16.msra.mxu0 0
        %1804 = vmatprep.subr.bf16.mxu0 0
        %1805 = vmatpush1.bf16.msra.mxu0 0
        %1806 = vmatprep.subr.bf16.mxu0 0
        %1807 = vmatpush1.bf16.msra.mxu0 0
        %1808 = vmatprep.subr.bf16.mxu0 0
        %1809 = vmatpush1.bf16.msra.mxu0 0
        %1810 = vmatprep.subr.bf16.mxu0 0
        %1811 = vmatpush1.bf16.msra.mxu0 0
        %1812 = vmatprep.subr.bf16.mxu0 0
        %1813 = vmatpush1.bf16.msra.mxu0 0
        %1814 = vmatprep.subr.bf16.mxu0 0
        %1815 = vmatpush1.bf16.msra.mxu0 0
        %1816 = vmatprep.subr.bf16.mxu0 0
        %1817 = vmatpush1.bf16.msra.mxu0 0
        %1818 = vmatprep.subr.bf16.mxu0 0
        %1819 = vmatpush1.bf16.msra.mxu0 0
        %1820 = vmatprep.subr.bf16.mxu0 0
        %1821 = vmatpush1.bf16.msra.mxu0 0
        %1822 = vmatprep.subr.bf16.mxu0 0
        %1823 = vmatpush1.bf16.msra.mxu0 0
        %1824 = vmatprep.mubr.bf16.mxu0 0
        %1825 = vmatmul.mubr.bf16.gmra.mrb[0].mxu0 %v1787
        %v1826 = vpop.f32.mrb[0].mxu0
        %v1827 = vadd.f32 %v1772, %v1826
        %v1828 = vpop.f32.mrb[0].mxu0
        %v1829 = vpop.f32.mrb[0].mxu0
        %v1830 = vadd.f32 %v1772, %v1829
        %v1831 = vpop.f32.mrb[0].mxu0
        %1832 = vmatprep.mubr.bf16.mxu0 0
        %1833 = vmatmul.mubr.bf16.gmra.mrb[0].mxu0 %v1790
        %v1834 = vpop.f32.mrb[0].mxu0
        %v1835 = vadd.f32 %v1772, %v1834
        %v1836 = vpop.f32.mrb[0].mxu0
        %v1837 = vpop.f32.mrb[0].mxu0
        %v1838 = vadd.f32 %v1772, %v1837
        %v1839 = vpop.f32.mrb[0].mxu0
        %1840 = vdwg.mxu0
        %v1841 = vmul.f32 %v1827, 0.5
        %v1842 = vmul.f32 %v1830, 0.5
        %v1843 = vmul.f32 %v1835, 0.5
        %v1844 = vmul.f32 %v1838, 0.5
        %v1845 = vmul.f32 %v1827, 0.044715
        %v1846 = vmul.f32 %v1830, 0.044715
        %v1847 = vmul.f32 %v1835, 0.044715
        %v1848 = vmul.f32 %v1838, 0.044715
        %v1849 = vmul.f32 %v1845, %v1827
        %v1850 = vmul.f32 %v1846, %v1830
        %v1851 = vmul.f32 %v1847, %v1835
        %v1852 = vmul.f32 %v1848, %v1838
        %v1853 = vmul.f32 %v1849, %v1827
        %v1854 = vmul.f32 %v1850, %v1830
        %v1855 = vmul.f32 %v1851, %v1835
        %v1856 = vmul.f32 %v1852, %v1838
        %v1857 = vadd.f32 %v1827, %v1853
        %v1858 = vadd.f32 %v1830, %v1854
        %v1859 = vadd.f32 %v1835, %v1855
        %v1860 = vadd.f32 %v1838, %v1856
        %v1861 = vmul.f32 %v1857, 0.7978846
        %v1862 = vmul.f32 %v1858, 0.7978846
        %v1863 = vmul.f32 %v1859, 0.7978846
        %v1864 = vmul.f32 %v1860, 0.7978846
        %v1865 = vtanh.pop %v1861
        %v1866 = vtanh.pop %v1862
        %v1867 = vtanh.pop %v1863
        %v1868 = vtanh.pop %v1864
        %v1869 = vadd.f32 %v1865, 1.0
        %v1870 = vadd.f32 %v1866, 1.0
        %v1871 = vadd.f32 %v1867, 1.0
        %v1872 = vadd.f32 %v1868, 1.0
        %v1873 = vmul.f32 %v1841, %v1869
        %v1874 = vmul.f32 %v1842, %v1870
        %v1875 = vmul.f32 %v1843, %v1871
        %v1876 = vmul.f32 %v1844, %v1872
        %v1877 = vpack.c.bf16 %v1874, %v1873
        %v1878 = vpack.c.bf16 %v1876, %v1875
        %v1880 = vlaneseq
        %v1881 = vshrl.u32 %v1880, 7
        %v1882 = vsub.s32 0, %v1881
        %v1883 = vrot.slane %v1162, %v1882
        %v1889 = vunpack.c.l.b16 %v1158
        %v1890 = vunpack.c.l.b16 %v1159
        %v1891 = vunpack.c.l.b16 %v1160
        %v1892 = vunpack.c.l.b16 %v1161
        %v1893 = vpack.c.b16 %v1890, %v1889
        %v1894 = vpack.c.b16 %v1892, %v1891
        %v1898 = vsel %vm1176, %v1877, 0
        %v1901 = vsel %vm1176, %v1878, 0
        %1903 = vmatprep.subr.bf16.mxu0 0
        %1904 = vmatpush1.bf16.msra.mxu0 %v1893
        %1905 = vmatprep.subr.bf16.mxu0 0
        %1906 = vmatpush1.bf16.msra.mxu0 %v1894
        %1907 = vmatprep.subr.bf16.mxu0 0
        %1908 = vmatpush1.bf16.msra.mxu0 0
        %1909 = vmatprep.subr.bf16.mxu0 0
        %1910 = vmatpush1.bf16.msra.mxu0 0
        %1911 = vmatprep.subr.bf16.mxu0 0
        %1912 = vmatpush1.bf16.msra.mxu0 0
        %1913 = vmatprep.subr.bf16.mxu0 0
        %1914 = vmatpush1.bf16.msra.mxu0 0
        %1915 = vmatprep.subr.bf16.mxu0 0
        %1916 = vmatpush1.bf16.msra.mxu0 0
        %1917 = vmatprep.subr.bf16.mxu0 0
        %1918 = vmatpush1.bf16.msra.mxu0 0
        %1919 = vmatprep.subr.bf16.mxu0 0
        %1920 = vmatpush1.bf16.msra.mxu0 0
        %1921 = vmatprep.subr.bf16.mxu0 0
        %1922 = vmatpush1.bf16.msra.mxu0 0
        %1923 = vmatprep.subr.bf16.mxu0 0
        %1924 = vmatpush1.bf16.msra.mxu0 0
        %1925 = vmatprep.subr.bf16.mxu0 0
        %1926 = vmatpush1.bf16.msra.mxu0 0
        %1927 = vmatprep.subr.bf16.mxu0 0
        %1928 = vmatpush1.bf16.msra.mxu0 0
        %1929 = vmatprep.subr.bf16.mxu0 0
        %1930 = vmatpush1.bf16.msra.mxu0 0
        %1931 = vmatprep.subr.bf16.mxu0 0
        %1932 = vmatpush1.bf16.msra.mxu0 0
        %1933 = vmatprep.subr.bf16.mxu0 0
        %1934 = vmatpush1.bf16.msra.mxu0 0
        %1935 = vmatprep.mubr.bf16.mxu0 0
        %1936 = vmatmul.mubr.bf16.gmra.mrb[0].mxu0 %v1898
        %v1937 = vpop.f32.mrb[0].mxu0
        %v1938 = vadd.f32 %v1883, %v1937
        %v1939 = vpop.f32.mrb[0].mxu0
        %v1940 = vpop.f32.mrb[0].mxu0
        %v1941 = vadd.f32 %v1883, %v1940
        %v1942 = vpop.f32.mrb[0].mxu0
        %1943 = vmatprep.mubr.bf16.mxu0 0
        %1944 = vmatmul.mubr.bf16.gmra.mrb[0].mxu0 %v1901
        %v1945 = vpop.f32.mrb[0].mxu0
        %v1946 = vadd.f32 %v1883, %v1945
        %v1947 = vpop.f32.mrb[0].mxu0
        %v1948 = vpop.f32.mrb[0].mxu0
        %v1949 = vadd.f32 %v1883, %v1948
        %v1950 = vpop.f32.mrb[0].mxu0
        %1951 = vdwg.mxu0
        %v1956 = vcombine.high %v1938, %v1938
        %v1957 = vcombine.high %v1941, %v1941
        %v1958 = vcombine.high %v1946, %v1946
        %v1959 = vcombine.high %v1949, %v1949
        %v1964 = vlaneseq
        %v1965 = vshrl.u32 %v1964, 7
        %v1966 = vsub.s32 0, %v1965
        %v1967 = vrot.slane %v1139, %v1966
        %1969 = vbcast.lane.b32.xlu0 %v1967, 256
        %v1970 = vpop.permute.xlu0 %1969
        %v1971 = vlaneseq
        %v1972 = vshrl.u32 %v1971, 7
        %v1973 = vsub.s32 1, %v1972
        %v1974 = vrot.slane %v1139, %v1973
        %1976 = vbcast.lane.b32.xlu0 %v1974, 256
        %v1977 = vpop.permute.xlu0 %1976
        %v1978 = vlaneseq
        %v1979 = vshrl.u32 %v1978, 7
        %v1980 = vsub.s32 2, %v1979
        %v1981 = vrot.slane %v1139, %v1980
        %1983 = vbcast.lane.b32.xlu0 %v1981, 256
        %v1984 = vpop.permute.xlu0 %1983
        %v1985 = vlaneseq
        %v1986 = vshrl.u32 %v1985, 7
        %v1987 = vsub.s32 3, %v1986
        %v1988 = vrot.slane %v1139, %v1987
        %1990 = vbcast.lane.b32.xlu0 %v1988, 256
        %v1991 = vpop.permute.xlu0 %1990
        %v1992 = vlaneseq
        %v1993 = vshrl.u32 %v1992, 7
        %v1994 = vsub.s32 4, %v1993
        %v1995 = vrot.slane %v1139, %v1994
        %1997 = vbcast.lane.b32.xlu0 %v1995, 256
        %v1998 = vpop.permute.xlu0 %1997
        %v1999 = vlaneseq
        %v2000 = vshrl.u32 %v1999, 7
        %v2001 = vsub.s32 5, %v2000
        %v2002 = vrot.slane %v1139, %v2001
        %2004 = vbcast.lane.b32.xlu0 %v2002, 256
        %v2005 = vpop.permute.xlu0 %2004
        %v2006 = vlaneseq
        %v2007 = vshrl.u32 %v2006, 7
        %v2008 = vsub.s32 6, %v2007
        %v2009 = vrot.slane %v1139, %v2008
        %2011 = vbcast.lane.b32.xlu0 %v2009, 256
        %v2012 = vpop.permute.xlu0 %2011
        %v2013 = vlaneseq
        %v2014 = vshrl.u32 %v2013, 7
        %v2015 = vsub.s32 7, %v2014
        %v2016 = vrot.slane %v1139, %v2015
        %2018 = vbcast.lane.b32.xlu0 %v2016, 256
        %v2019 = vpop.permute.xlu0 %2018
        %v2020 = vmul.f32 %v1938, %v1970
        %v2021 = vmul.f32 %v1956, %v1977
        %v2022 = vmul.f32 %v1941, %v1984
        %v2023 = vmul.f32 %v1957, %v1991
        %v2024 = vmul.f32 %v1946, %v1998
        %v2025 = vmul.f32 %v1958, %v2005
        %v2026 = vmul.f32 %v1949, %v2012
        %v2027 = vmul.f32 %v1959, %v2019
        %vm2028 = vcmask 257024
        %v2029 = vsel %vm2028, %v2020, 0.0
        %v2030 = vrot.slane %v2029, 4
        %v2031 = vadd.f32 %v2029, %v2030
        %v2032 = vrot.slane %v2031, 2
        %v2033 = vadd.f32 %v2031, %v2032
        %v2034 = vrot.slane %v2033, 1
        %v2035 = vadd.f32 %v2033, %v2034
        %v2036 = vsel %vm2028, %v2021, 0.0
        %v2037 = vrot.slane %v2036, 4
        %v2038 = vadd.f32 %v2036, %v2037
        %v2039 = vrot.slane %v2038, 2
        %v2040 = vadd.f32 %v2038, %v2039
        %v2041 = vrot.slane %v2040, 1
        %v2042 = vadd.f32 %v2040, %v2041
        %v2043 = vsel %vm2028, %v2022, 0.0
        %v2044 = vrot.slane %v2043, 4
        %v2045 = vadd.f32 %v2043, %v2044
        %v2046 = vrot.slane %v2045, 2
        %v2047 = vadd.f32 %v2045, %v2046
        %v2048 = vrot.slane %v2047, 1
        %v2049 = vadd.f32 %v2047, %v2048
        %v2050 = vsel %vm2028, %v2023, 0.0
        %v2051 = vrot.slane %v2050, 4
        %v2052 = vadd.f32 %v2050, %v2051
        %v2053 = vrot.slane %v2052, 2
        %v2054 = vadd.f32 %v2052, %v2053
        %v2055 = vrot.slane %v2054, 1
        %v2056 = vadd.f32 %v2054, %v2055
        %v2057 = vsel %vm2028, %v2024, 0.0
        %v2058 = vrot.slane %v2057, 4
        %v2059 = vadd.f32 %v2057, %v2058
        %v2060 = vrot.slane %v2059, 2
        %v2061 = vadd.f32 %v2059, %v2060
        %v2062 = vrot.slane %v2061, 1
        %v2063 = vadd.f32 %v2061, %v2062
        %v2064 = vsel %vm2028, %v2025, 0.0
        %v2065 = vrot.slane %v2064, 4
        %v2066 = vadd.f32 %v2064, %v2065
        %v2067 = vrot.slane %v2066, 2
        %v2068 = vadd.f32 %v2066, %v2067
        %v2069 = vrot.slane %v2068, 1
        %v2070 = vadd.f32 %v2068, %v2069
        %v2071 = vsel %vm2028, %v2026, 0.0
        %v2072 = vrot.slane %v2071, 4
        %v2073 = vadd.f32 %v2071, %v2072
        %v2074 = vrot.slane %v2073, 2
        %v2075 = vadd.f32 %v2073, %v2074
        %v2076 = vrot.slane %v2075, 1
        %v2077 = vadd.f32 %v2075, %v2076
        %v2078 = vsel %vm2028, %v2027, 0.0
        %v2079 = vrot.slane %v2078, 4
        %v2080 = vadd.f32 %v2078, %v2079
        %v2081 = vrot.slane %v2080, 2
        %v2082 = vadd.f32 %v2080, %v2081
        %v2083 = vrot.slane %v2082, 1
        %v2084 = vadd.f32 %v2082, %v2083
        %v2085 = vmul.f32 %v2035, 0.033333335
        %v2086 = vmul.f32 %v2042, 0.033333335
        %v2087 = vmul.f32 %v2049, 0.033333335
        %v2088 = vmul.f32 %v2056, 0.033333335
        %v2089 = vmul.f32 %v2063, 0.033333335
        %v2090 = vmul.f32 %v2070, 0.033333335
        %v2091 = vmul.f32 %v2077, 0.033333335
        %v2092 = vmul.f32 %v2084, 0.033333335
        %vm2101 = vcmask 1041409
        %v2102 = vsel %vm2101, %v2086, %v2085
        %vm2103 = vcmask 1042434
        %v2104 = vsel %vm2103, %v2087, %v2102
        %vm2105 = vcmask 1043459
        %v2106 = vsel %vm2105, %v2088, %v2104
        %vm2107 = vcmask 1044484
        %v2108 = vsel %vm2107, %v2089, %v2106
        %vm2109 = vcmask 1045509
        %v2110 = vsel %vm2109, %v2090, %v2108
        %vm2111 = vcmask 1046534
        %v2112 = vsel %vm2111, %v2091, %v2110
        %vm2113 = vcmask 1047559
        %v2114 = vsel %vm2113, %v2092, %v2112
        %v2116 = vadd.f32 %v1127, %v2114
        %v2117 = vld [vmem:[#allocation31] sm:$0x1]
        %v2118 = vld [vmem:[#allocation32] sm:$0x1]
        %v2119 = vsel %vm1176, %v2116, 0.0
        %2120 = vadd.xlane.f32.xlu0 %v2119
        %v2121 = vpop.xlane.xlu0 %2120
        %v2122 = vrcp.pop 32.0
        %v2123 = vmul.f32 %v2121, %v2122
        %v2124 = vsub.f32 %v2116, %v2123
        %v2125 = vmul.f32 %v2124, %v2124
        %v2126 = vsel %vm1176, %v2125, 0.0
        %2127 = vadd.xlane.f32.xlu0 %v2126
        %v2128 = vpop.xlane.xlu0 %2127
        %v2129 = vmul.f32 %v2128, %v2122
        %v2130 = vadd.f32 %v2129, 1e-05
        %v2131 = vrsqrt.pop %v2130
        %v2132 = vmul.f32 %v2124, %v2131
        %v2134 = vlaneseq
        %v2135 = vshrl.u32 %v2134, 7
        %v2136 = vsub.s32 0, %v2135
        %v2137 = vrot.slane %v2117, %v2136
        %v2139 = vmul.f32 %v2132, %v2137
        %v2141 = vlaneseq
        %v2142 = vshrl.u32 %v2141, 7
        %v2143 = vsub.s32 0, %v2142
        %v2144 = vrot.slane %v2118, %v2143
        %v2146 = vadd.f32 %v2139, %v2144
        %v2147 = vpack.c.bf16 %v2146, %v2146
        %v2148 = vld [vmem:[#allocation25] sm:$0xf]
        %v2149 = vld [vmem:[#allocation25 + $0x4] sm:$0xf]
        %v2150 = vld [vmem:[#allocation25 + $0x8] sm:$0xf]
        %v2151 = vld [vmem:[#allocation25 + $0xc] sm:$0xf]
        %v2152 = vld [vmem:[#allocation26] sm:$0x1]
        %v2154 = vlaneseq
        %v2155 = vshrl.u32 %v2154, 7
        %v2156 = vsub.s32 0, %v2155
        %v2157 = vrot.slane %v2152, %v2156
        %v2163 = vunpack.c.l.b16 %v2148
        %v2164 = vunpack.c.l.b16 %v2149
        %v2165 = vunpack.c.l.b16 %v2150
        %v2166 = vunpack.c.l.b16 %v2151
        %v2167 = vpack.c.b16 %v2164, %v2163
        %v2168 = vpack.c.b16 %v2166, %v2165
        %v2172 = vsel %vm1176, %v2147, 0
        %2174 = vmatprep.subr.bf16.mxu0 0
        %2175 = vmatpush1.bf16.msra.mxu0 %v2167
        %2176 = vmatprep.subr.bf16.mxu0 0
        %2177 = vmatpush1.bf16.msra.mxu0 %v2168
        %2178 = vmatprep.subr.bf16.mxu0 0
        %2179 = vmatpush1.bf16.msra.mxu0 0
        %2180 = vmatprep.subr.bf16.mxu0 0
        %2181 = vmatpush1.bf16.msra.mxu0 0
        %2182 = vmatprep.subr.bf16.mxu0 0
        %2183 = vmatpush1.bf16.msra.mxu0 0
        %2184 = vmatprep.subr.bf16.mxu0 0
        %2185 = vmatpush1.bf16.msra.mxu0 0
        %2186 = vmatprep.subr.bf16.mxu0 0
        %2187 = vmatpush1.bf16.msra.mxu0 0
        %2188 = vmatprep.subr.bf16.mxu0 0
        %2189 = vmatpush1.bf16.msra.mxu0 0
        %2190 = vmatprep.subr.bf16.mxu0 0
        %2191 = vmatpush1.bf16.msra.mxu0 0
        %2192 = vmatprep.subr.bf16.mxu0 0
        %2193 = vmatpush1.bf16.msra.mxu0 0
        %2194 = vmatprep.subr.bf16.mxu0 0
        %2195 = vmatpush1.bf16.msra.mxu0 0
        %2196 = vmatprep.subr.bf16.mxu0 0
        %2197 = vmatpush1.bf16.msra.mxu0 0
        %2198 = vmatprep.subr.bf16.mxu0 0
        %2199 = vmatpush1.bf16.msra.mxu0 0
        %2200 = vmatprep.subr.bf16.mxu0 0
        %2201 = vmatpush1.bf16.msra.mxu0 0
        %2202 = vmatprep.subr.bf16.mxu0 0
        %2203 = vmatpush1.bf16.msra.mxu0 0
        %2204 = vmatprep.subr.bf16.mxu0 0
        %2205 = vmatpush1.bf16.msra.mxu0 0
        %2206 = vmatprep.mubr.bf16.mxu0 0
        %2207 = vmatmul.mubr.bf16.gmra.mrb[0].mxu0 %v2172
        %v2208 = vpop.f32.mrb[0].mxu0
        %v2209 = vadd.f32 %v2157, %v2208
        %v2210 = vpop.f32.mrb[0].mxu0
        %v2211 = vpop.f32.mrb[0].mxu0
        %v2212 = vpop.f32.mrb[0].mxu0
        %2213 = vdwg.mxu0
        %v2214 = vmul.f32 %v2209, 0.5
        %v2215 = vmul.f32 %v2209, 0.044715
        %v2216 = vmul.f32 %v2215, %v2209
        %v2217 = vmul.f32 %v2216, %v2209
        %v2218 = vadd.f32 %v2209, %v2217
        %v2219 = vmul.f32 %v2218, 0.7978846
        %v2220 = vtanh.pop %v2219
        %v2221 = vadd.f32 %v2220, 1.0
        %v2222 = vmul.f32 %v2214, %v2221
        %v2223 = vpack.c.bf16 %v2222, %v2222
        %v2224 = vld [vmem:[#allocation28] sm:$0xf]
        %v2225 = vld [vmem:[#allocation28 + $0x4] sm:$0xf]
        %v2226 = vld [vmem:[#allocation28 + $0x8] sm:$0xf]
        %v2227 = vld [vmem:[#allocation28 + $0xc] sm:$0xf]
        %v2228 = vld [vmem:[#allocation28 + $0x10] sm:$0xf]
        %v2229 = vld [vmem:[#allocation28 + $0x14] sm:$0xf]
        %v2230 = vld [vmem:[#allocation28 + $0x18] sm:$0xf]
        %v2231 = vld [vmem:[#allocation28 + $0x1c] sm:$0xf]
        %v2232 = vld [vmem:[#allocation28 + $0x20] sm:$0xf]
        %v2233 = vld [vmem:[#allocation28 + $0x24] sm:$0xf]
        %v2234 = vld [vmem:[#allocation28 + $0x28] sm:$0xf]
        %v2235 = vld [vmem:[#allocation28 + $0x2c] sm:$0xf]
        %v2236 = vld [vmem:[#allocation28 + $0x30] sm:$0xf]
        %v2237 = vld [vmem:[#allocation28 + $0x34] sm:$0xf]
        %v2238 = vld [vmem:[#allocation28 + $0x38] sm:$0xf]
        %v2239 = vld [vmem:[#allocation28 + $0x3c] sm:$0xf]
        %v2240 = vld [vmem:[#allocation29] sm:$0x1]
        %v2242 = vlaneseq
        %v2243 = vshrl.u32 %v2242, 7
        %v2244 = vsub.s32 0, %v2243
        %v2245 = vrot.slane %v2240, %v2244
        %v2263 = vunpack.c.l.b16 %v2224
        %v2264 = vunpack.c.l.b16 %v2225
        %v2265 = vunpack.c.l.b16 %v2226
        %v2266 = vunpack.c.l.b16 %v2227
        %v2267 = vunpack.c.l.b16 %v2228
        %v2268 = vunpack.c.l.b16 %v2229
        %v2269 = vunpack.c.l.b16 %v2230
        %v2270 = vunpack.c.l.b16 %v2231
        %v2271 = vunpack.c.l.b16 %v2232
        %v2272 = vunpack.c.l.b16 %v2233
        %v2273 = vunpack.c.l.b16 %v2234
        %v2274 = vunpack.c.l.b16 %v2235
        %v2275 = vunpack.c.l.b16 %v2236
        %v2276 = vunpack.c.l.b16 %v2237
        %v2277 = vunpack.c.l.b16 %v2238
        %v2278 = vunpack.c.l.b16 %v2239
        %v2279 = vpack.c.b16 %v2264, %v2263
        %v2280 = vpack.c.b16 %v2266, %v2265
        %v2281 = vpack.c.b16 %v2268, %v2267
        %v2282 = vpack.c.b16 %v2270, %v2269
        %v2283 = vpack.c.b16 %v2272, %v2271
        %v2284 = vpack.c.b16 %v2274, %v2273
        %v2285 = vpack.c.b16 %v2276, %v2275
        %v2286 = vpack.c.b16 %v2278, %v2277
        %2295 = vmatprep.subr.bf16.mxu0 0
        %2296 = vmatpush1.bf16.msra.mxu0 %v2279
        %2297 = vmatprep.subr.bf16.mxu0 0
        %2298 = vmatpush1.bf16.msra.mxu0 %v2280
        %2299 = vmatprep.subr.bf16.mxu0 0
        %2300 = vmatpush1.bf16.msra.mxu0 %v2281
        %2301 = vmatprep.subr.bf16.mxu0 0
        %2302 = vmatpush1.bf16.msra.mxu0 %v2282
        %2303 = vmatprep.subr.bf16.mxu0 0
        %2304 = vmatpush1.bf16.msra.mxu0 %v2283
        %2305 = vmatprep.subr.bf16.mxu0 0
        %2306 = vmatpush1.bf16.msra.mxu0 %v2284
        %2307 = vmatprep.subr.bf16.mxu0 0
        %2308 = vmatpush1.bf16.msra.mxu0 %v2285
        %2309 = vmatprep.subr.bf16.mxu0 0
        %2310 = vmatpush1.bf16.msra.mxu0 %v2286
        %2311 = vmatprep.subr.bf16.mxu0 0
        %2312 = vmatpush1.bf16.msra.mxu0 0
        %2313 = vmatprep.subr.bf16.mxu0 0
        %2314 = vmatpush1.bf16.msra.mxu0 0
        %2315 = vmatprep.subr.bf16.mxu0 0
        %2316 = vmatpush1.bf16.msra.mxu0 0
        %2317 = vmatprep.subr.bf16.mxu0 0
        %2318 = vmatpush1.bf16.msra.mxu0 0
        %2319 = vmatprep.subr.bf16.mxu0 0
        %2320 = vmatpush1.bf16.msra.mxu0 0
        %2321 = vmatprep.subr.bf16.mxu0 0
        %2322 = vmatpush1.bf16.msra.mxu0 0
        %2323 = vmatprep.subr.bf16.mxu0 0
        %2324 = vmatpush1.bf16.msra.mxu0 0
        %2325 = vmatprep.subr.bf16.mxu0 0
        %2326 = vmatpush1.bf16.msra.mxu0 0
        %2327 = vmatprep.mubr.bf16.mxu0 0
        %2328 = vmatmul.mubr.bf16.gmra.mrb[0].mxu0 %v2223
        %v2329 = vpop.f32.mrb[0].mxu0
        %v2330 = vadd.f32 %v2245, %v2329
        %v2331 = vpop.f32.mrb[0].mxu0
        %v2332 = vpop.f32.mrb[0].mxu0
        %v2333 = vpop.f32.mrb[0].mxu0
        %2334 = vdwg.mxu0
        %v2335 = vadd.f32 %v2146, %v2330
        %v2336 = vld [vmem:[#allocation34] sm:$0x1]
        %v2337 = vld [vmem:[#allocation35] sm:$0x1]
        %v2338 = vsel %vm1176, %v2335, 0.0
        %2339 = vadd.xlane.f32.xlu0 %v2338
        %v2340 = vpop.xlane.xlu0 %2339
        %v2341 = vmul.f32 %v2340, %v2122
        %v2342 = vsub.f32 %v2335, %v2341
        %v2343 = vmul.f32 %v2342, %v2342
        %v2344 = vsel %vm1176, %v2343, 0.0
        %2345 = vadd.xlane.f32.xlu0 %v2344
        %v2346 = vpop.xlane.xlu0 %2345
        %v2347 = vmul.f32 %v2346, %v2122
        %v2348 = vadd.f32 %v2347, 1e-05
        %v2349 = vrsqrt.pop %v2348
        %v2350 = vmul.f32 %v2342, %v2349
        %v2352 = vlaneseq
        %v2353 = vshrl.u32 %v2352, 7
        %v2354 = vsub.s32 0, %v2353
        %v2355 = vrot.slane %v2336, %v2354
        %v2357 = vmul.f32 %v2350, %v2355
        %v2359 = vlaneseq
        %v2360 = vshrl.u32 %v2359, 7
        %v2361 = vsub.s32 0, %v2360
        %v2362 = vrot.slane %v2337, %v2361
        %v2364 = vadd.f32 %v2357, %v2362
        %2366 = vset.pattern.permute.xlu0 0
        %2367 = vperm.xlu0 %2366, %v1138
        %v2368 = vpop.permute.xlu0 %2367
        %v2370 = vmul.f32 %v2364, %v2368
        %2371 = vst.msk [vmem:[%s1124] sm:$0xff] %vm1176, %v2370
        %s2372 = sand.u32 %s580, 1
        %s2373 = scalar_lea.sflag [#allocation4], %s2372
        %s2374 = sand.u32 %s580, 1
        %s2375 = smul.addr %s2374, 8
        %s2376 = scalar_lea.vmem [#allocation37], %s2375
        // Predicated region
        $region197: #{tpu_custom_call.1} parent=107 // pred_check
          %p2377 = pneg %p590
        $region198: #{tpu_custom_call.1} parent=107 // pred_check_branch
          %2379 = sbr.rel (%p2377) target = $region200
        $region199: #{tpu_custom_call.1} parent=107 // pred_region
          %s2381 = ssub.s32 128, 128
          %2382 = vsyncadd %s2373, %s2381
          %s2383 = sadd.s32 %s61, %s60
          %s2384 = smul.addr %s2383, 128
          %s2385 = scalar_lea.hbm %s22, %s2384
          %s2387 = sshll.u32 %s2376, 4
          %s2388 = int_to_ptr.vmem [resolvable:$true] %s2387
          %2390 = dma.vmem_to_hbm [thread:$0]  %s2388, 128, %s2385, %s2373
        $region200: #{tpu_custom_call.1} parent=107 // pred_fallthru
          _
      $region108: #{tpu_custom_call.1} parent=5 // pred_fallthru
        _
      %p2391 = scmp.le.s32.totalorder 2, %s51
      // Predicated region
      $region201: #{tpu_custom_call.1} parent=5 // pred_check
        %p2392 = pneg %p2391
      $region202: #{tpu_custom_call.1} parent=5 // pred_check_branch
        %2394 = sbr.rel (%p2392) target = $region204
      $region203: #{tpu_custom_call.1} parent=5 // pred_region
        %s2395 = ssub.s32 %s51, 2
        // Predicated region
        $region205: #{tpu_custom_call.1} parent=203 // pred_check
          %p2396 = pneg %p596
        $region206: #{tpu_custom_call.1} parent=203 // pred_check_branch
          %2398 = sbr.rel (%p2396) target = $region208
        $region207: #{tpu_custom_call.1} parent=203 // pred_region
          %s2399 = sand.u32 %s581, 1
          %s2400 = scalar_lea.sflag [#allocation4], %s2399
          %s2401 = sand.u32 %s581, 1
          %s2402 = smul.addr %s2401, 8
          %s2403 = scalar_lea.vmem [#allocation37], %s2402
          %2404 = dma.done %s2400, 128
        $region208: #{tpu_custom_call.1} parent=203 // pred_fallthru
          _
      $region204: #{tpu_custom_call.1} parent=5 // pred_fallthru
        _
    $region6: #{tpu_custom_call.1} parent=1 // loop_footer
      %s55 = sadd.s32 1, %s51
    $region7: #{tpu_custom_call.1} parent=1 // loop_footer_branch
      %50 = sbr.rel target = $region3
    $region8: #{tpu_custom_call.1} parent=1 // loop_exit
      _
    %2405 = vsyncpa [#allocation3], 1
    %s2406 = scalar_lea.sflag [#allocation3], 1
    %2407 = vsyncpa %s2406, 1
    %2408 = vsyncpa [#allocation6], 1
    %s2409 = scalar_lea.sflag [#allocation6], 1
    %2410 = vsyncpa %s2409, 1
    %2411 = vsyncpa [#allocation9], 1
    %s2412 = scalar_lea.sflag [#allocation9], 1
    %2413 = vsyncpa %s2412, 1
    %2414 = vsyncpa [#allocation12], 1
    %s2415 = scalar_lea.sflag [#allocation12], 1
    %2416 = vsyncpa %s2415, 1
    %2417 = vsyncpa [#allocation15], 1
    %2418 = vsyncpa [#allocation18], 1
    %2419 = vsyncpa [#allocation21], 1
    %2420 = vsyncpa [#allocation24], 1
    %2421 = vsyncpa [#allocation27], 1
    %2422 = vsyncpa [#allocation30], 1
    %2423 = vsyncpa [#allocation33], 1
    %2424 = vsyncpa [#allocation36], 1
    %2425 = vsyncpa [#allocation4], 1
    %s2426 = scalar_lea.sflag [#allocation4], 1
    %2427 = vsyncpa %s2426, 1

</llo_original>
